<compile_context>
chip_gen: v7x
topology: tpu7x:2x2x1
jax: 0.10.0
libtpu: 0.0.40
codegen_flags: <defaults>
</compile_context>

<pallas_src>
import functools
import math

import jax
import jax.numpy as jnp
from jax import lax
from jax.experimental import pallas as pl
from jax.experimental.pallas import tpu as pltpu


def _self_attention_kernel(xq_ref, xkv_ref, wq_ref, bq_ref, wkv_ref, bkv_ref,
                           wp_ref, bp_ref, lnw_ref, lnb_ref, out_ref,
                           q_scr, m_scr, l_scr, acc_scr,
                           *, nheads, dh, ln_eps, exp_dtype):
    ni = nheads * dh
    ki = pl.program_id(2)
    nt = (((1,), (1,)), ((), ()))          # A @ B.T (contract last dims, no batch dims)

    # --- first kv step for this (batch, q-tile): project Q once, reset online-softmax state.
    @pl.when(ki == 0)
    def _init():
        xq = xq_ref[...].astype(jnp.bfloat16)                                # (tq, NI)
        q = jnp.dot(xq, wq_ref[...], preferred_element_type=jnp.float32)     # one full-NI matmul
        q_scr[...] = (q + bq_ref[...]).astype(jnp.bfloat16)                  # 1/scale pre-folded
        m_scr[...] = jnp.full(m_scr.shape, -jnp.inf, jnp.float32)
        l_scr[...] = jnp.zeros(l_scr.shape, jnp.float32)
        acc_scr[...] = jnp.zeros(acc_scr.shape, jnp.float32)

    # --- K|V projection for this kv tile: ONE lane-dense (tk,NI)x(NI,2*NI) MXU matmul.
    xkv = xkv_ref[...].astype(jnp.bfloat16)                                   # (tk, NI)
    kv = jnp.dot(xkv, wkv_ref[...], preferred_element_type=jnp.float32) + bkv_ref[...]
    kv = kv.astype(jnp.bfloat16)                                              # (tk, 2*NI): [K | V]

    # --- per-head online softmax (attention core is inherently dh-deep; all ops stay 2-D,
    #     heads are just static lane slices of the wide projections / accumulator).
    for h in range(nheads):
        sl = slice(h * dh, (h + 1) * dh)
        q_h = q_scr[:, sl]                                                    # (tq, dh) bf16
        k_h = kv[:, sl]                                                       # (tk, dh) bf16
        v_h = kv[:, ni + h * dh:ni + (h + 1) * dh]                            # (tk, dh) bf16

        s = lax.dot_general(q_h, k_h, nt, preferred_element_type=jnp.float32)  # (tq, tk) f32
        m_prev = m_scr[h]                                                     # (tq, 1)
        l_prev = l_scr[h]
        m_new = jnp.maximum(m_prev, jnp.max(s, axis=-1, keepdims=True))
        alpha = jnp.exp(m_prev - m_new)                                       # f32 for stability
        p = jnp.exp((s - m_new).astype(exp_dtype))                            # bf16 exp on v6e/v7x
        l_scr[h] = alpha * l_prev + jnp.sum(p.astype(jnp.float32), axis=-1, keepdims=True)
        m_scr[h] = m_new
        pv = jnp.dot(p.astype(jnp.bfloat16), v_h, preferred_element_type=jnp.float32)  # (tq, dh)
        acc_scr[:, sl] = alpha * acc_scr[:, sl] + pv

    # --- last kv step: normalize, merged-head projection, residual, LayerNorm, store.
    @pl.when(ki == pl.num_programs(2) - 1)
    def _finalize():
        for h in range(nheads):
            sl = slice(h * dh, (h + 1) * dh)
            acc_scr[:, sl] = acc_scr[:, sl] * pl.reciprocal(l_scr[h], approx=True)
        ctx = acc_scr[...].astype(jnp.bfloat16)                               # (tq, NI) head-major
        y = jnp.dot(ctx, wp_ref[...], preferred_element_type=jnp.float32) + bp_ref[...]
        # TODO(synk): training-mode dropout (pltpu.prng_*) not implemented — inference identity.
        y = y + xq_ref[...]                                                   # residual (f32)
        mean = jnp.mean(y, axis=-1, keepdims=True)
        var = jnp.mean(jnp.square(y - mean), axis=-1, keepdims=True)
        y = (y - mean) * lax.rsqrt(var + ln_eps)
        out_ref[...] = (y * lnw_ref[...] + lnb_ref[...]).astype(out_ref.dtype)


def _pick_block(s, cap=256):
    """Largest power-of-two tile <= cap that divides s (falls back to s)."""
    for t in (cap, 128, 64, 32, 16, 8):
        if t <= s and s % t == 0:
            return t
    return s


def _softmax_exp_dtype():
    """bf16 exp on v6e/v7x (bf16 EUP); f32 on v5 and older (no bf16 EUP)."""
    try:
        kind = jax.devices()[0].device_kind.lower()
    except Exception:
        return jnp.bfloat16
    if any(v in kind for v in ("v2", "v3", "v4", "v5")):
        return jnp.float32
    return jnp.bfloat16


def _vmem_limit_bytes():
    """Generation-aware scoped-VMEM limit: ~70% of capacity, capped at 64 MiB
    (~64 MiB on 128 MiB v5e/v6e, ~45 MiB on 64 MiB v7x)."""
    try:
        cap = int(pltpu.get_tpu_info().vmem_capacity_bytes)
    except Exception:
        return 48 * 1024 * 1024
    return max(32 * 1024 * 1024, min(64 * 1024 * 1024, int(cap * 0.7)))


def self_attention(inp, kqv_w, kqv_b, proj_w, proj_b, ln_w, ln_b, *,
                   nheads, ln_eps=1e-5, q_block=None, kv_block=None):
    """inp: (B, S, NI) float32. Weights in PyTorch convention:
       kqv_w (3*NI, NI), kqv_b (3*NI,), proj_w (NI, NI), proj_b (NI,), ln_w/ln_b (NI,)."""
    B, S, NI = inp.shape
    assert NI % nheads == 0
    H, dh = nheads, NI // nheads
    inv_scale = 1.0 / math.sqrt(NI / nheads)

    tq = q_block or _pick_block(S)
    tk = kv_block or _pick_block(S)
    assert S % tq == 0 and S % tk == 0

    # --- wrapper-side weight repacking (head-major columns; 1/scale folded into the Q path).
    # PyTorch kqv output feature j = h*3*dh + c, with per-head [Q | K | V] blocks of width dh.
    w = jnp.asarray(kqv_w, jnp.float32).T.reshape(NI, H, 3, dh)
    wq = (w[:, :, 0, :].reshape(NI, NI) * inv_scale).astype(jnp.bfloat16)                 # (NI, NI)
    wkv = jnp.concatenate([w[:, :, 1, :].reshape(NI, NI),
                           w[:, :, 2, :].reshape(NI, NI)], axis=1).astype(jnp.bfloat16)   # (NI, 2NI)
    bv = jnp.asarray(kqv_b, jnp.float32).reshape(H, 3, dh)
    bq = bv[:, 0, :].reshape(1, NI) * inv_scale
    bkv = jnp.concatenate([bv[:, 1, :].reshape(1, NI),
                           bv[:, 2, :].reshape(1, NI)], axis=1)                            # (1, 2NI)
    wp = jnp.asarray(proj_w, jnp.float32).T.astype(jnp.bfloat16)                           # (NI, NI)
    bp = jnp.asarray(proj_b, jnp.float32).reshape(1, NI)
    lnw = jnp.asarray(ln_w, jnp.float32).reshape(1, NI)
    lnb = jnp.asarray(ln_b, jnp.float32).reshape(1, NI)

    kernel = functools.partial(_self_attention_kernel, nheads=H, dh=dh,
                               ln_eps=ln_eps, exp_dtype=_softmax_exp_dtype())

    inv_map = lambda b, qi, ki: (0, 0)    # grid-invariant weights / biases / LN params

    return pl.pallas_call(
        kernel,
        out_shape=jax.ShapeDtypeStruct((B, S, NI), jnp.float32),
        grid=(B, S // tq, S // tk),
        in_specs=[
            pl.BlockSpec((None, tq, NI), lambda b, qi, ki: (b, qi, 0)),   # rows for Q / residual
            pl.BlockSpec((None, tk, NI), lambda b, qi, ki: (b, ki, 0)),   # rows for K/V
            pl.BlockSpec((NI, NI), inv_map),          # Wq   (1/scale folded in)
            pl.BlockSpec((1, NI), inv_map),           # bq   (1/scale folded in)
            pl.BlockSpec((NI, 2 * NI), inv_map),      # [Wk | Wv]
            pl.BlockSpec((1, 2 * NI), inv_map),       # [bk | bv]
            pl.BlockSpec((NI, NI), inv_map),          # Wproj
            pl.BlockSpec((1, NI), inv_map),           # bproj
            pl.BlockSpec((1, NI), inv_map),           # LN gamma
            pl.BlockSpec((1, NI), inv_map),           # LN beta
        ],
        out_specs=pl.BlockSpec((None, tq, NI), lambda b, qi, ki: (b, qi, 0)),
        scratch_shapes=[
            pltpu.VMEM((tq, NI), jnp.bfloat16),       # Q for the current q-tile (head-major cols)
            pltpu.VMEM((H, tq, 1), jnp.float32),      # online-softmax running max (per head)
            pltpu.VMEM((H, tq, 1), jnp.float32),      # online-softmax running denom (per head)
            pltpu.VMEM((tq, NI), jnp.float32),        # context accumulator (heads merged on lanes)
        ],
        compiler_params=pltpu.CompilerParams(
            dimension_semantics=("parallel", "parallel", "arbitrary"),
            vmem_limit_bytes=_vmem_limit_bytes(),
        ),
    )(inp, inp, wq, bq, wkv, bkv, wp, bp, lnw, lnb)


def self_attention_ref(inp, kqv_w, kqv_b, proj_w, proj_b, ln_w, ln_b, *, nheads, ln_eps=1e-5):
    """Pure-JAX f32 mirror of the PyTorch forward (inference mode), for verification."""
    B, S, NI = inp.shape
    scale = math.sqrt(NI / nheads)
    x = inp @ kqv_w.T + kqv_b                                           # (B, S, 3*NI)
    x = jnp.concatenate(jnp.split(x, nheads, axis=-1), axis=0)          # (B*H, S, 3*dh)
    q, k, v = jnp.split(x, 3, axis=-1)                                  # each (B*H, S, dh)
    s = jnp.einsum('bij,bkj->bik', q, k) / scale
    p = jax.nn.softmax(s, axis=-1)
    x = jnp.einsum('bik,bkd->bid', p, v)                                # (B*H, S, dh)
    x = jnp.concatenate(jnp.split(x, nheads, axis=0), axis=-1)          # (B, S, NI)
    x = x @ proj_w.T + proj_b
    x = x + inp
    mean = jnp.mean(x, axis=-1, keepdims=True)
    var = jnp.mean((x - mean) ** 2, axis=-1, keepdims=True)
    return (x - mean) / jnp.sqrt(var + ln_eps) * ln_w + ln_b


if __name__ == "__main__":
    B, S, NI, NHEADS = 2, 8, 32, 4

    key = jax.random.PRNGKey(0)
    k_inp, k_kw, k_kb, k_pw, k_pb, k_lw, k_lb, k_inp2 = jax.random.split(key, 8)

    inp = jax.random.normal(k_inp, (B, S, NI), dtype=jnp.float32)
    kqv_w = jax.random.normal(k_kw, (3 * NI, NI), dtype=jnp.float32) * 0.1
    kqv_b = jax.random.normal(k_kb, (3 * NI,), dtype=jnp.float32) * 0.1
    proj_w = jax.random.normal(k_pw, (NI, NI), dtype=jnp.float32) * 0.1
    proj_b = jax.random.normal(k_pb, (NI,), dtype=jnp.float32) * 0.1
    ln_w = 1.0 + 0.1 * jax.random.normal(k_lw, (NI,), dtype=jnp.float32)
    ln_b = 0.1 * jax.random.normal(k_lb, (NI,), dtype=jnp.float32)

    out = jax.block_until_ready(
        self_attention(inp, kqv_w, kqv_b, proj_w, proj_b, ln_w, ln_b, nheads=NHEADS))
    ref = jax.block_until_ready(
        self_attention_ref(inp, kqv_w, kqv_b, proj_w, proj_b, ln_w, ln_b, nheads=NHEADS))
    assert out.shape == (B, S, NI) and out.dtype == jnp.float32
    # bf16 matmul operands / bf16 exp (f32 accumulation) + approx reciprocal -> relaxed tolerance.
    max_err = float(jnp.max(jnp.abs(out - ref)))
    assert jnp.allclose(out, ref, atol=4e-2, rtol=4e-2), max_err

    # Also exercise the flash-tiled path (multiple q/kv tiles + online-softmax accumulation).
    S2 = 32
    inp2 = jax.random.normal(k_inp2, (B, S2, NI), dtype=jnp.float32)
    out2 = jax.block_until_ready(
        self_attention(inp2, kqv_w, kqv_b, proj_w, proj_b, ln_w, ln_b,
                       nheads=NHEADS, q_block=8, kv_block=8))
    ref2 = jax.block_until_ready(
        self_attention_ref(inp2, kqv_w, kqv_b, proj_w, proj_b, ln_w, ln_b, nheads=NHEADS))
    max_err2 = float(jnp.max(jnp.abs(out2 - ref2)))
    assert jnp.allclose(out2, ref2, atol=4e-2, rtol=4e-2), max_err2

    print("KERNEL_OK")
</pallas_src>

<mosaic_0001>
module attributes {stable_mosaic.version = 11 : i64} {
  func.func @_self_attention_kernel(%arg0: i32, %arg1: i32, %arg2: i32, %arg3: memref<1x8x32xf32, #tpu.memory_space<vmem>>, %arg4: memref<1x8x32xf32, #tpu.memory_space<vmem>>, %arg5: memref<32x32xbf16, #tpu.memory_space<vmem>>, %arg6: memref<1x32xf32, #tpu.memory_space<vmem>>, %arg7: memref<32x64xbf16, #tpu.memory_space<vmem>>, %arg8: memref<1x64xf32, #tpu.memory_space<vmem>>, %arg9: memref<32x32xbf16, #tpu.memory_space<vmem>>, %arg10: memref<1x32xf32, #tpu.memory_space<vmem>>, %arg11: memref<1x32xf32, #tpu.memory_space<vmem>>, %arg12: memref<1x32xf32, #tpu.memory_space<vmem>>, %arg13: memref<1x8x32xf32, #tpu.memory_space<vmem>>, %arg14: memref<8x32xbf16, #tpu.memory_space<vmem>>, %arg15: memref<4x8x1xf32, #tpu.memory_space<vmem>>, %arg16: memref<4x8x1xf32, #tpu.memory_space<vmem>>, %arg17: memref<8x32xf32, #tpu.memory_space<vmem>>) attributes {dimension_semantics = [#tpu.dimension_semantics<parallel>, #tpu.dimension_semantics<parallel>, #tpu.dimension_semantics<arbitrary>], iteration_bounds = array<i64: 2, 1, 1>, scalar_prefetch = 0 : i64, scratch_operands = 4 : i64, tpu.core_type = #tpu.core_type<tc>, window_params = [{transform_indices = @transform_0, window_bounds = array<i64: 1, 8, 32>}, {transform_indices = @transform_1, window_bounds = array<i64: 1, 8, 32>}, {pipeline_mode = #tpu.pipeline_mode<synchronous>, transform_indices = @transform_2, window_bounds = array<i64: 32, 32>}, {pipeline_mode = #tpu.pipeline_mode<synchronous>, transform_indices = @transform_3, window_bounds = array<i64: 1, 32>}, {pipeline_mode = #tpu.pipeline_mode<synchronous>, transform_indices = @transform_4, window_bounds = array<i64: 32, 64>}, {pipeline_mode = #tpu.pipeline_mode<synchronous>, transform_indices = @transform_5, window_bounds = array<i64: 1, 64>}, {pipeline_mode = #tpu.pipeline_mode<synchronous>, transform_indices = @transform_6, window_bounds = array<i64: 32, 32>}, {pipeline_mode = #tpu.pipeline_mode<synchronous>, transform_indices = @transform_7, window_bounds = array<i64: 1, 32>}, {pipeline_mode = #tpu.pipeline_mode<synchronous>, transform_indices = @transform_8, window_bounds = array<i64: 1, 32>}, {pipeline_mode = #tpu.pipeline_mode<synchronous>, transform_indices = @transform_9, window_bounds = array<i64: 1, 32>}, {transform_indices = @transform_10, window_bounds = array<i64: 1, 8, 32>}]} {
    %c0_i32 = arith.constant 0 : i32
    %0 = arith.cmpi eq, %arg2, %c0_i32 : i32
    %1 = arith.extui %0 : i1 to i32
    %c0_i32_0 = arith.constant 0 : i32
    %2 = arith.cmpi ne, %1, %c0_i32_0 : i32
    scf.if %2 {
      %c0_91 = arith.constant 0 : index
      %c0_92 = arith.constant 0 : index
      %c0_93 = arith.constant 0 : index
      %151 = vector.load %arg3[%c0_91, %c0_92, %c0_93] : memref<1x8x32xf32, #tpu.memory_space<vmem>>, vector<1x8x32xf32>
      %152 = vector.shape_cast %151 : vector<1x8x32xf32> to vector<8x32xf32>
      %153 = arith.truncf %152 : vector<8x32xf32> to vector<8x32xbf16>
      %c0_94 = arith.constant 0 : index
      %c0_95 = arith.constant 0 : index
      %154 = vector.load %arg5[%c0_94, %c0_95] : memref<32x32xbf16, #tpu.memory_space<vmem>>, vector<32x32xbf16>
      %cst_96 = arith.constant dense<0.000000e+00> : vector<8x32xf32>
      %155 = tpu.matmul %153, %154, %cst_96 {dimension_numbers = #tpu.dot_dimension_numbers<[1], [0], [0], [1], [0, 0, 1, 1], [], []>} : vector<8x32xbf16>, vector<32x32xbf16>, vector<8x32xf32> -> vector<8x32xf32>
      %c0_97 = arith.constant 0 : index
      %c0_98 = arith.constant 0 : index
      %156 = vector.load %arg6[%c0_97, %c0_98] : memref<1x32xf32, #tpu.memory_space<vmem>>, vector<1x32xf32>
      %157 = vector.broadcast %156 : vector<1x32xf32> to vector<8x32xf32>
      %158 = arith.addf %155, %157 : vector<8x32xf32>
      %159 = arith.truncf %158 : vector<8x32xf32> to vector<8x32xbf16>
      %c0_99 = arith.constant 0 : index
      %c0_100 = arith.constant 0 : index
      %160 = vector.load %arg14[%c0_99, %c0_100] : memref<8x32xbf16, #tpu.memory_space<vmem>>, vector<8x32xbf16>
      tpu.vector_store %arg14[%c0_99, %c0_100], %159 {strides = array<i32>} : memref<8x32xbf16, #tpu.memory_space<vmem>>, vector<8x32xbf16>,
      %cst_101 = arith.constant 0xFF800000 : f32
      %161 = vector.broadcast %cst_101 : f32 to vector<4x8x1xf32>
      %c0_102 = arith.constant 0 : index
      %c0_103 = arith.constant 0 : index
      %c0_104 = arith.constant 0 : index
      %162 = vector.load %arg15[%c0_102, %c0_103, %c0_104] : memref<4x8x1xf32, #tpu.memory_space<vmem>>, vector<4x8x1xf32>
      tpu.vector_store %arg15[%c0_102, %c0_103, %c0_104], %161 {strides = array<i32>} : memref<4x8x1xf32, #tpu.memory_space<vmem>>, vector<4x8x1xf32>,
      %cst_105 = arith.constant 0.000000e+00 : f32
      %163 = vector.broadcast %cst_105 : f32 to vector<4x8x1xf32>
      %c0_106 = arith.constant 0 : index
      %c0_107 = arith.constant 0 : index
      %c0_108 = arith.constant 0 : index
      %164 = vector.load %arg16[%c0_106, %c0_107, %c0_108] : memref<4x8x1xf32, #tpu.memory_space<vmem>>, vector<4x8x1xf32>
      tpu.vector_store %arg16[%c0_106, %c0_107, %c0_108], %163 {strides = array<i32>} : memref<4x8x1xf32, #tpu.memory_space<vmem>>, vector<4x8x1xf32>,
      %cst_109 = arith.constant 0.000000e+00 : f32
      %165 = vector.broadcast %cst_109 : f32 to vector<8x32xf32>
      %c0_110 = arith.constant 0 : index
      %c0_111 = arith.constant 0 : index
      %166 = vector.load %arg17[%c0_110, %c0_111] : memref<8x32xf32, #tpu.memory_space<vmem>>, vector<8x32xf32>
      tpu.vector_store %arg17[%c0_110, %c0_111], %165 {strides = array<i32>} : memref<8x32xf32, #tpu.memory_space<vmem>>, vector<8x32xf32>,
    } else {
    }
    %c0 = arith.constant 0 : index
    %c0_1 = arith.constant 0 : index
    %c0_2 = arith.constant 0 : index
    %3 = vector.load %arg4[%c0, %c0_1, %c0_2] : memref<1x8x32xf32, #tpu.memory_space<vmem>>, vector<1x8x32xf32>
    %4 = vector.shape_cast %3 : vector<1x8x32xf32> to vector<8x32xf32>
    %5 = arith.truncf %4 : vector<8x32xf32> to vector<8x32xbf16>
    %c0_3 = arith.constant 0 : index
    %c0_4 = arith.constant 0 : index
    %6 = vector.load %arg7[%c0_3, %c0_4] : memref<32x64xbf16, #tpu.memory_space<vmem>>, vector<32x64xbf16>
    %cst = arith.constant dense<0.000000e+00> : vector<8x64xf32>
    %7 = tpu.matmul %5, %6, %cst {dimension_numbers = #tpu.dot_dimension_numbers<[1], [0], [0], [1], [0, 0, 1, 1], [], []>} : vector<8x32xbf16>, vector<32x64xbf16>, vector<8x64xf32> -> vector<8x64xf32>
    %c0_5 = arith.constant 0 : index
    %c0_6 = arith.constant 0 : index
    %8 = vector.load %arg8[%c0_5, %c0_6] : memref<1x64xf32, #tpu.memory_space<vmem>>, vector<1x64xf32>
    %9 = vector.broadcast %8 : vector<1x64xf32> to vector<8x64xf32>
    %10 = arith.addf %7, %9 : vector<8x64xf32>
    %11 = arith.truncf %10 : vector<8x64xf32> to vector<8x64xbf16>
    %c0_7 = arith.constant 0 : index
    %c0_8 = arith.constant 0 : index
    %12 = vector.load %arg14[%c0_7, %c0_8] : memref<8x32xbf16, #tpu.memory_space<vmem>>, vector<8x8xbf16>
    %13 = vector.extract_strided_slice %11 {offsets = [0, 0], sizes = [8, 8], strides = [1, 1]} : vector<8x64xbf16> to vector<8x8xbf16>
    %14 = vector.extract_strided_slice %11 {offsets = [0, 32], sizes = [8, 8], strides = [1, 1]} : vector<8x64xbf16> to vector<8x8xbf16>
    %cst_9 = arith.constant dense<0.000000e+00> : vector<8x8xf32>
    %15 = tpu.matmul %12, %13, %cst_9 {dimension_numbers = #tpu.dot_dimension_numbers<[1], [1], [0], [0], [0, 0, 1, 0], [], []>} : vector<8x8xbf16>, vector<8x8xbf16>, vector<8x8xf32> -> vector<8x8xf32>
    %c0_10 = arith.constant 0 : index
    %c0_11 = arith.constant 0 : index
    %c0_12 = arith.constant 0 : index
    %16 = vector.load %arg15[%c0_10, %c0_11, %c0_12] : memref<4x8x1xf32, #tpu.memory_space<vmem>>, vector<1x8x1xf32>
    %17 = vector.shape_cast %16 : vector<1x8x1xf32> to vector<8x1xf32>
    %c0_13 = arith.constant 0 : index
    %c0_14 = arith.constant 0 : index
    %c0_15 = arith.constant 0 : index
    %18 = vector.load %arg16[%c0_13, %c0_14, %c0_15] : memref<4x8x1xf32, #tpu.memory_space<vmem>>, vector<1x8x1xf32>
    %19 = vector.shape_cast %18 : vector<1x8x1xf32> to vector<8x1xf32>
    %cst_16 = arith.constant dense<0xFF800000> : vector<8xf32>
    %20 = vector.multi_reduction <maximumf>, %15, %cst_16 [1] : vector<8x8xf32> to vector<8xf32>
    %21 = vector.shape_cast %20 : vector<8xf32> to vector<8x1xf32>
    %22 = arith.maximumf %17, %21 : vector<8x1xf32>
    %23 = arith.subf %17, %22 : vector<8x1xf32>
    %24 = math.exp %23 : vector<8x1xf32>
    %25 = vector.broadcast %22 : vector<8x1xf32> to vector<8x8xf32>
    %26 = arith.subf %15, %25 : vector<8x8xf32>
    %27 = arith.truncf %26 : vector<8x8xf32> to vector<8x8xbf16>
    %28 = math.exp %27 : vector<8x8xbf16>
    %29 = arith.mulf %24, %19 : vector<8x1xf32>
    %30 = arith.extf %28 : vector<8x8xbf16> to vector<8x8xf32>
    %cst_17 = arith.constant dense<0.000000e+00> : vector<8xf32>
    %31 = vector.multi_reduction <add>, %30, %cst_17 [1] : vector<8x8xf32> to vector<8xf32>
    %32 = vector.shape_cast %31 : vector<8xf32> to vector<8x1xf32>
    %33 = arith.addf %29, %32 : vector<8x1xf32>
    %c0_18 = arith.constant 0 : index
    %c0_19 = arith.constant 0 : index
    %c0_20 = arith.constant 0 : index
    %34 = vector.load %arg16[%c0_18, %c0_19, %c0_20] : memref<4x8x1xf32, #tpu.memory_space<vmem>>, vector<1x8x1xf32>
    %35 = vector.shape_cast %34 : vector<1x8x1xf32> to vector<8x1xf32>
    %36 = vector.shape_cast %33 : vector<8x1xf32> to vector<1x8x1xf32>
    tpu.vector_store %arg16[%c0_18, %c0_19, %c0_20], %36 {strides = array<i32>} : memref<4x8x1xf32, #tpu.memory_space<vmem>>, vector<1x8x1xf32>,
    %c0_21 = arith.constant 0 : index
    %c0_22 = arith.constant 0 : index
    %c0_23 = arith.constant 0 : index
    %37 = vector.load %arg15[%c0_21, %c0_22, %c0_23] : memref<4x8x1xf32, #tpu.memory_space<vmem>>, vector<1x8x1xf32>
    %38 = vector.shape_cast %37 : vector<1x8x1xf32> to vector<8x1xf32>
    %39 = vector.shape_cast %22 : vector<8x1xf32> to vector<1x8x1xf32>
    tpu.vector_store %arg15[%c0_21, %c0_22, %c0_23], %39 {strides = array<i32>} : memref<4x8x1xf32, #tpu.memory_space<vmem>>, vector<1x8x1xf32>,
    %cst_24 = arith.constant dense<0.000000e+00> : vector<8x8xf32>
    %40 = tpu.matmul %28, %14, %cst_24 {dimension_numbers = #tpu.dot_dimension_numbers<[1], [0], [0], [1], [0, 0, 1, 1], [], []>} : vector<8x8xbf16>, vector<8x8xbf16>, vector<8x8xf32> -> vector<8x8xf32>
    %c0_25 = arith.constant 0 : index
    %c0_26 = arith.constant 0 : index
    %41 = vector.load %arg17[%c0_25, %c0_26] : memref<8x32xf32, #tpu.memory_space<vmem>>, vector<8x8xf32>
    %42 = vector.broadcast %24 : vector<8x1xf32> to vector<8x8xf32>
    %43 = arith.mulf %42, %41 : vector<8x8xf32>
    %44 = arith.addf %43, %40 : vector<8x8xf32>
    %c0_27 = arith.constant 0 : index
    %c0_28 = arith.constant 0 : index
    %45 = vector.load %arg17[%c0_27, %c0_28] : memref<8x32xf32, #tpu.memory_space<vmem>>, vector<8x8xf32>
    tpu.vector_store %arg17[%c0_27, %c0_28], %44 {strides = array<i32>} : memref<8x32xf32, #tpu.memory_space<vmem>>, vector<8x8xf32>,
    %c0_29 = arith.constant 0 : index
    %c8 = arith.constant 8 : index
    %46 = vector.load %arg14[%c0_29, %c8] : memref<8x32xbf16, #tpu.memory_space<vmem>>, vector<8x8xbf16>
    %47 = vector.extract_strided_slice %11 {offsets = [0, 8], sizes = [8, 8], strides = [1, 1]} : vector<8x64xbf16> to vector<8x8xbf16>
    %48 = vector.extract_strided_slice %11 {offsets = [0, 40], sizes = [8, 8], strides = [1, 1]} : vector<8x64xbf16> to vector<8x8xbf16>
    %cst_30 = arith.constant dense<0.000000e+00> : vector<8x8xf32>
    %49 = tpu.matmul %46, %47, %cst_30 {dimension_numbers = #tpu.dot_dimension_numbers<[1], [1], [0], [0], [0, 0, 1, 0], [], []>} : vector<8x8xbf16>, vector<8x8xbf16>, vector<8x8xf32> -> vector<8x8xf32>
    %c1 = arith.constant 1 : index
    %c0_31 = arith.constant 0 : index
    %c0_32 = arith.constant 0 : index
    %50 = vector.load %arg15[%c1, %c0_31, %c0_32] : memref<4x8x1xf32, #tpu.memory_space<vmem>>, vector<1x8x1xf32>
    %51 = vector.shape_cast %50 : vector<1x8x1xf32> to vector<8x1xf32>
    %c1_33 = arith.constant 1 : index
    %c0_34 = arith.constant 0 : index
    %c0_35 = arith.constant 0 : index
    %52 = vector.load %arg16[%c1_33, %c0_34, %c0_35] : memref<4x8x1xf32, #tpu.memory_space<vmem>>, vector<1x8x1xf32>
    %53 = vector.shape_cast %52 : vector<1x8x1xf32> to vector<8x1xf32>
    %cst_36 = arith.constant dense<0xFF800000> : vector<8xf32>
    %54 = vector.multi_reduction <maximumf>, %49, %cst_36 [1] : vector<8x8xf32> to vector<8xf32>
    %55 = vector.shape_cast %54 : vector<8xf32> to vector<8x1xf32>
    %56 = arith.maximumf %51, %55 : vector<8x1xf32>
    %57 = arith.subf %51, %56 : vector<8x1xf32>
    %58 = math.exp %57 : vector<8x1xf32>
    %59 = vector.broadcast %56 : vector<8x1xf32> to vector<8x8xf32>
    %60 = arith.subf %49, %59 : vector<8x8xf32>
    %61 = arith.truncf %60 : vector<8x8xf32> to vector<8x8xbf16>
    %62 = math.exp %61 : vector<8x8xbf16>
    %63 = arith.mulf %58, %53 : vector<8x1xf32>
    %64 = arith.extf %62 : vector<8x8xbf16> to vector<8x8xf32>
    %cst_37 = arith.constant dense<0.000000e+00> : vector<8xf32>
    %65 = vector.multi_reduction <add>, %64, %cst_37 [1] : vector<8x8xf32> to vector<8xf32>
    %66 = vector.shape_cast %65 : vector<8xf32> to vector<8x1xf32>
    %67 = arith.addf %63, %66 : vector<8x1xf32>
    %c1_38 = arith.constant 1 : index
    %c0_39 = arith.constant 0 : index
    %c0_40 = arith.constant 0 : index
    %68 = vector.load %arg16[%c1_38, %c0_39, %c0_40] : memref<4x8x1xf32, #tpu.memory_space<vmem>>, vector<1x8x1xf32>
    %69 = vector.shape_cast %68 : vector<1x8x1xf32> to vector<8x1xf32>
    %70 = vector.shape_cast %67 : vector<8x1xf32> to vector<1x8x1xf32>
    tpu.vector_store %arg16[%c1_38, %c0_39, %c0_40], %70 {strides = array<i32>} : memref<4x8x1xf32, #tpu.memory_space<vmem>>, vector<1x8x1xf32>,
    %c1_41 = arith.constant 1 : index
    %c0_42 = arith.constant 0 : index
    %c0_43 = arith.constant 0 : index
    %71 = vector.load %arg15[%c1_41, %c0_42, %c0_43] : memref<4x8x1xf32, #tpu.memory_space<vmem>>, vector<1x8x1xf32>
    %72 = vector.shape_cast %71 : vector<1x8x1xf32> to vector<8x1xf32>
    %73 = vector.shape_cast %56 : vector<8x1xf32> to vector<1x8x1xf32>
    tpu.vector_store %arg15[%c1_41, %c0_42, %c0_43], %73 {strides = array<i32>} : memref<4x8x1xf32, #tpu.memory_space<vmem>>, vector<1x8x1xf32>,
    %cst_44 = arith.constant dense<0.000000e+00> : vector<8x8xf32>
    %74 = tpu.matmul %62, %48, %cst_44 {dimension_numbers = #tpu.dot_dimension_numbers<[1], [0], [0], [1], [0, 0, 1, 1], [], []>} : vector<8x8xbf16>, vector<8x8xbf16>, vector<8x8xf32> -> vector<8x8xf32>
    %c0_45 = arith.constant 0 : index
    %c8_46 = arith.constant 8 : index
    %75 = vector.load %arg17[%c0_45, %c8_46] : memref<8x32xf32, #tpu.memory_space<vmem>>, vector<8x8xf32>
    %76 = vector.broadcast %58 : vector<8x1xf32> to vector<8x8xf32>
    %77 = arith.mulf %76, %75 : vector<8x8xf32>
    %78 = arith.addf %77, %74 : vector<8x8xf32>
    %c0_47 = arith.constant 0 : index
    %c8_48 = arith.constant 8 : index
    %79 = vector.load %arg17[%c0_47, %c8_48] : memref<8x32xf32, #tpu.memory_space<vmem>>, vector<8x8xf32>
    tpu.vector_store %arg17[%c0_47, %c8_48], %78 {strides = array<i32>} : memref<8x32xf32, #tpu.memory_space<vmem>>, vector<8x8xf32>,
    %c0_49 = arith.constant 0 : index
    %c16 = arith.constant 16 : index
    %80 = vector.load %arg14[%c0_49, %c16] : memref<8x32xbf16, #tpu.memory_space<vmem>>, vector<8x8xbf16>
    %81 = vector.extract_strided_slice %11 {offsets = [0, 16], sizes = [8, 8], strides = [1, 1]} : vector<8x64xbf16> to vector<8x8xbf16>
    %82 = vector.extract_strided_slice %11 {offsets = [0, 48], sizes = [8, 8], strides = [1, 1]} : vector<8x64xbf16> to vector<8x8xbf16>
    %cst_50 = arith.constant dense<0.000000e+00> : vector<8x8xf32>
    %83 = tpu.matmul %80, %81, %cst_50 {dimension_numbers = #tpu.dot_dimension_numbers<[1], [1], [0], [0], [0, 0, 1, 0], [], []>} : vector<8x8xbf16>, vector<8x8xbf16>, vector<8x8xf32> -> vector<8x8xf32>
    %c2 = arith.constant 2 : index
    %c0_51 = arith.constant 0 : index
    %c0_52 = arith.constant 0 : index
    %84 = vector.load %arg15[%c2, %c0_51, %c0_52] : memref<4x8x1xf32, #tpu.memory_space<vmem>>, vector<1x8x1xf32>
    %85 = vector.shape_cast %84 : vector<1x8x1xf32> to vector<8x1xf32>
    %c2_53 = arith.constant 2 : index
    %c0_54 = arith.constant 0 : index
    %c0_55 = arith.constant 0 : index
    %86 = vector.load %arg16[%c2_53, %c0_54, %c0_55] : memref<4x8x1xf32, #tpu.memory_space<vmem>>, vector<1x8x1xf32>
    %87 = vector.shape_cast %86 : vector<1x8x1xf32> to vector<8x1xf32>
    %cst_56 = arith.constant dense<0xFF800000> : vector<8xf32>
    %88 = vector.multi_reduction <maximumf>, %83, %cst_56 [1] : vector<8x8xf32> to vector<8xf32>
    %89 = vector.shape_cast %88 : vector<8xf32> to vector<8x1xf32>
    %90 = arith.maximumf %85, %89 : vector<8x1xf32>
    %91 = arith.subf %85, %90 : vector<8x1xf32>
    %92 = math.exp %91 : vector<8x1xf32>
    %93 = vector.broadcast %90 : vector<8x1xf32> to vector<8x8xf32>
    %94 = arith.subf %83, %93 : vector<8x8xf32>
    %95 = arith.truncf %94 : vector<8x8xf32> to vector<8x8xbf16>
    %96 = math.exp %95 : vector<8x8xbf16>
    %97 = arith.mulf %92, %87 : vector<8x1xf32>
    %98 = arith.extf %96 : vector<8x8xbf16> to vector<8x8xf32>
    %cst_57 = arith.constant dense<0.000000e+00> : vector<8xf32>
    %99 = vector.multi_reduction <add>, %98, %cst_57 [1] : vector<8x8xf32> to vector<8xf32>
    %100 = vector.shape_cast %99 : vector<8xf32> to vector<8x1xf32>
    %101 = arith.addf %97, %100 : vector<8x1xf32>
    %c2_58 = arith.constant 2 : index
    %c0_59 = arith.constant 0 : index
    %c0_60 = arith.constant 0 : index
    %102 = vector.load %arg16[%c2_58, %c0_59, %c0_60] : memref<4x8x1xf32, #tpu.memory_space<vmem>>, vector<1x8x1xf32>
    %103 = vector.shape_cast %102 : vector<1x8x1xf32> to vector<8x1xf32>
    %104 = vector.shape_cast %101 : vector<8x1xf32> to vector<1x8x1xf32>
    tpu.vector_store %arg16[%c2_58, %c0_59, %c0_60], %104 {strides = array<i32>} : memref<4x8x1xf32, #tpu.memory_space<vmem>>, vector<1x8x1xf32>,
    %c2_61 = arith.constant 2 : index
    %c0_62 = arith.constant 0 : index
    %c0_63 = arith.constant 0 : index
    %105 = vector.load %arg15[%c2_61, %c0_62, %c0_63] : memref<4x8x1xf32, #tpu.memory_space<vmem>>, vector<1x8x1xf32>
    %106 = vector.shape_cast %105 : vector<1x8x1xf32> to vector<8x1xf32>
    %107 = vector.shape_cast %90 : vector<8x1xf32> to vector<1x8x1xf32>
    tpu.vector_store %arg15[%c2_61, %c0_62, %c0_63], %107 {strides = array<i32>} : memref<4x8x1xf32, #tpu.memory_space<vmem>>, vector<1x8x1xf32>,
    %cst_64 = arith.constant dense<0.000000e+00> : vector<8x8xf32>
    %108 = tpu.matmul %96, %82, %cst_64 {dimension_numbers = #tpu.dot_dimension_numbers<[1], [0], [0], [1], [0, 0, 1, 1], [], []>} : vector<8x8xbf16>, vector<8x8xbf16>, vector<8x8xf32> -> vector<8x8xf32>
    %c0_65 = arith.constant 0 : index
    %c16_66 = arith.constant 16 : index
    %109 = vector.load %arg17[%c0_65, %c16_66] : memref<8x32xf32, #tpu.memory_space<vmem>>, vector<8x8xf32>
    %110 = vector.broadcast %92 : vector<8x1xf32> to vector<8x8xf32>
    %111 = arith.mulf %110, %109 : vector<8x8xf32>
    %112 = arith.addf %111, %108 : vector<8x8xf32>
    %c0_67 = arith.constant 0 : index
    %c16_68 = arith.constant 16 : index
    %113 = vector.load %arg17[%c0_67, %c16_68] : memref<8x32xf32, #tpu.memory_space<vmem>>, vector<8x8xf32>
    tpu.vector_store %arg17[%c0_67, %c16_68], %112 {strides = array<i32>} : memref<8x32xf32, #tpu.memory_space<vmem>>, vector<8x8xf32>,
    %c0_69 = arith.constant 0 : index
    %c24 = arith.constant 24 : index
    %114 = vector.load %arg14[%c0_69, %c24] : memref<8x32xbf16, #tpu.memory_space<vmem>>, vector<8x8xbf16>
    %115 = vector.extract_strided_slice %11 {offsets = [0, 24], sizes = [8, 8], strides = [1, 1]} : vector<8x64xbf16> to vector<8x8xbf16>
    %116 = vector.extract_strided_slice %11 {offsets = [0, 56], sizes = [8, 8], strides = [1, 1]} : vector<8x64xbf16> to vector<8x8xbf16>
    %cst_70 = arith.constant dense<0.000000e+00> : vector<8x8xf32>
    %117 = tpu.matmul %114, %115, %cst_70 {dimension_numbers = #tpu.dot_dimension_numbers<[1], [1], [0], [0], [0, 0, 1, 0], [], []>} : vector<8x8xbf16>, vector<8x8xbf16>, vector<8x8xf32> -> vector<8x8xf32>
    %c3 = arith.constant 3 : index
    %c0_71 = arith.constant 0 : index
    %c0_72 = arith.constant 0 : index
    %118 = vector.load %arg15[%c3, %c0_71, %c0_72] : memref<4x8x1xf32, #tpu.memory_space<vmem>>, vector<1x8x1xf32>
    %119 = vector.shape_cast %118 : vector<1x8x1xf32> to vector<8x1xf32>
    %c3_73 = arith.constant 3 : index
    %c0_74 = arith.constant 0 : index
    %c0_75 = arith.constant 0 : index
    %120 = vector.load %arg16[%c3_73, %c0_74, %c0_75] : memref<4x8x1xf32, #tpu.memory_space<vmem>>, vector<1x8x1xf32>
    %121 = vector.shape_cast %120 : vector<1x8x1xf32> to vector<8x1xf32>
    %cst_76 = arith.constant dense<0xFF800000> : vector<8xf32>
    %122 = vector.multi_reduction <maximumf>, %117, %cst_76 [1] : vector<8x8xf32> to vector<8xf32>
    %123 = vector.shape_cast %122 : vector<8xf32> to vector<8x1xf32>
    %124 = arith.maximumf %119, %123 : vector<8x1xf32>
    %125 = arith.subf %119, %124 : vector<8x1xf32>
    %126 = math.exp %125 : vector<8x1xf32>
    %127 = vector.broadcast %124 : vector<8x1xf32> to vector<8x8xf32>
    %128 = arith.subf %117, %127 : vector<8x8xf32>
    %129 = arith.truncf %128 : vector<8x8xf32> to vector<8x8xbf16>
    %130 = math.exp %129 : vector<8x8xbf16>
    %131 = arith.mulf %126, %121 : vector<8x1xf32>
    %132 = arith.extf %130 : vector<8x8xbf16> to vector<8x8xf32>
    %cst_77 = arith.constant dense<0.000000e+00> : vector<8xf32>
    %133 = vector.multi_reduction <add>, %132, %cst_77 [1] : vector<8x8xf32> to vector<8xf32>
    %134 = vector.shape_cast %133 : vector<8xf32> to vector<8x1xf32>
    %135 = arith.addf %131, %134 : vector<8x1xf32>
    %c3_78 = arith.constant 3 : index
    %c0_79 = arith.constant 0 : index
    %c0_80 = arith.constant 0 : index
    %136 = vector.load %arg16[%c3_78, %c0_79, %c0_80] : memref<4x8x1xf32, #tpu.memory_space<vmem>>, vector<1x8x1xf32>
    %137 = vector.shape_cast %136 : vector<1x8x1xf32> to vector<8x1xf32>
    %138 = vector.shape_cast %135 : vector<8x1xf32> to vector<1x8x1xf32>
    tpu.vector_store %arg16[%c3_78, %c0_79, %c0_80], %138 {strides = array<i32>} : memref<4x8x1xf32, #tpu.memory_space<vmem>>, vector<1x8x1xf32>,
    %c3_81 = arith.constant 3 : index
    %c0_82 = arith.constant 0 : index
    %c0_83 = arith.constant 0 : index
    %139 = vector.load %arg15[%c3_81, %c0_82, %c0_83] : memref<4x8x1xf32, #tpu.memory_space<vmem>>, vector<1x8x1xf32>
    %140 = vector.shape_cast %139 : vector<1x8x1xf32> to vector<8x1xf32>
    %141 = vector.shape_cast %124 : vector<8x1xf32> to vector<1x8x1xf32>
    tpu.vector_store %arg15[%c3_81, %c0_82, %c0_83], %141 {strides = array<i32>} : memref<4x8x1xf32, #tpu.memory_space<vmem>>, vector<1x8x1xf32>,
    %cst_84 = arith.constant dense<0.000000e+00> : vector<8x8xf32>
    %142 = tpu.matmul %130, %116, %cst_84 {dimension_numbers = #tpu.dot_dimension_numbers<[1], [0], [0], [1], [0, 0, 1, 1], [], []>} : vector<8x8xbf16>, vector<8x8xbf16>, vector<8x8xf32> -> vector<8x8xf32>
    %c0_85 = arith.constant 0 : index
    %c24_86 = arith.constant 24 : index
    %143 = vector.load %arg17[%c0_85, %c24_86] : memref<8x32xf32, #tpu.memory_space<vmem>>, vector<8x8xf32>
    %144 = vector.broadcast %126 : vector<8x1xf32> to vector<8x8xf32>
    %145 = arith.mulf %144, %143 : vector<8x8xf32>
    %146 = arith.addf %145, %142 : vector<8x8xf32>
    %c0_87 = arith.constant 0 : index
    %c24_88 = arith.constant 24 : index
    %147 = vector.load %arg17[%c0_87, %c24_88] : memref<8x32xf32, #tpu.memory_space<vmem>>, vector<8x8xf32>
    tpu.vector_store %arg17[%c0_87, %c24_88], %146 {strides = array<i32>} : memref<8x32xf32, #tpu.memory_space<vmem>>, vector<8x8xf32>,
    %c0_i32_89 = arith.constant 0 : i32
    %148 = arith.cmpi eq, %arg2, %c0_i32_89 : i32
    %149 = arith.extui %148 : i1 to i32
    %c0_i32_90 = arith.constant 0 : i32
    %150 = arith.cmpi ne, %149, %c0_i32_90 : i32
    scf.if %150 {
      %c0_91 = arith.constant 0 : index
      %c0_92 = arith.constant 0 : index
      %151 = vector.load %arg17[%c0_91, %c0_92] : memref<8x32xf32, #tpu.memory_space<vmem>>, vector<8x8xf32>
      %c0_93 = arith.constant 0 : index
      %c0_94 = arith.constant 0 : index
      %c0_95 = arith.constant 0 : index
      %152 = vector.load %arg16[%c0_93, %c0_94, %c0_95] : memref<4x8x1xf32, #tpu.memory_space<vmem>>, vector<1x8x1xf32>
      %153 = vector.shape_cast %152 : vector<1x8x1xf32> to vector<8x1xf32>
      %154 = tpu.reciprocal %153 {approx = true} : vector<8x1xf32> -> vector<8x1xf32>
      %155 = vector.broadcast %154 : vector<8x1xf32> to vector<8x8xf32>
      %156 = arith.mulf %151, %155 : vector<8x8xf32>
      %c0_96 = arith.constant 0 : index
      %c0_97 = arith.constant 0 : index
      %157 = vector.load %arg17[%c0_96, %c0_97] : memref<8x32xf32, #tpu.memory_space<vmem>>, vector<8x8xf32>
      tpu.vector_store %arg17[%c0_96, %c0_97], %156 {strides = array<i32>} : memref<8x32xf32, #tpu.memory_space<vmem>>, vector<8x8xf32>,
      %c0_98 = arith.constant 0 : index
      %c8_99 = arith.constant 8 : index
      %158 = vector.load %arg17[%c0_98, %c8_99] : memref<8x32xf32, #tpu.memory_space<vmem>>, vector<8x8xf32>
      %c1_100 = arith.constant 1 : index
      %c0_101 = arith.constant 0 : index
      %c0_102 = arith.constant 0 : index
      %159 = vector.load %arg16[%c1_100, %c0_101, %c0_102] : memref<4x8x1xf32, #tpu.memory_space<vmem>>, vector<1x8x1xf32>
      %160 = vector.shape_cast %159 : vector<1x8x1xf32> to vector<8x1xf32>
      %161 = tpu.reciprocal %160 {approx = true} : vector<8x1xf32> -> vector<8x1xf32>
      %162 = vector.broadcast %161 : vector<8x1xf32> to vector<8x8xf32>
      %163 = arith.mulf %158, %162 : vector<8x8xf32>
      %c0_103 = arith.constant 0 : index
      %c8_104 = arith.constant 8 : index
      %164 = vector.load %arg17[%c0_103, %c8_104] : memref<8x32xf32, #tpu.memory_space<vmem>>, vector<8x8xf32>
      tpu.vector_store %arg17[%c0_103, %c8_104], %163 {strides = array<i32>} : memref<8x32xf32, #tpu.memory_space<vmem>>, vector<8x8xf32>,
      %c0_105 = arith.constant 0 : index
      %c16_106 = arith.constant 16 : index
      %165 = vector.load %arg17[%c0_105, %c16_106] : memref<8x32xf32, #tpu.memory_space<vmem>>, vector<8x8xf32>
      %c2_107 = arith.constant 2 : index
      %c0_108 = arith.constant 0 : index
      %c0_109 = arith.constant 0 : index
      %166 = vector.load %arg16[%c2_107, %c0_108, %c0_109] : memref<4x8x1xf32, #tpu.memory_space<vmem>>, vector<1x8x1xf32>
      %167 = vector.shape_cast %166 : vector<1x8x1xf32> to vector<8x1xf32>
      %168 = tpu.reciprocal %167 {approx = true} : vector<8x1xf32> -> vector<8x1xf32>
      %169 = vector.broadcast %168 : vector<8x1xf32> to vector<8x8xf32>
      %170 = arith.mulf %165, %169 : vector<8x8xf32>
      %c0_110 = arith.constant 0 : index
      %c16_111 = arith.constant 16 : index
      %171 = vector.load %arg17[%c0_110, %c16_111] : memref<8x32xf32, #tpu.memory_space<vmem>>, vector<8x8xf32>
      tpu.vector_store %arg17[%c0_110, %c16_111], %170 {strides = array<i32>} : memref<8x32xf32, #tpu.memory_space<vmem>>, vector<8x8xf32>,
      %c0_112 = arith.constant 0 : index
      %c24_113 = arith.constant 24 : index
      %172 = vector.load %arg17[%c0_112, %c24_113] : memref<8x32xf32, #tpu.memory_space<vmem>>, vector<8x8xf32>
      %c3_114 = arith.constant 3 : index
      %c0_115 = arith.constant 0 : index
      %c0_116 = arith.constant 0 : index
      %173 = vector.load %arg16[%c3_114, %c0_115, %c0_116] : memref<4x8x1xf32, #tpu.memory_space<vmem>>, vector<1x8x1xf32>
      %174 = vector.shape_cast %173 : vector<1x8x1xf32> to vector<8x1xf32>
      %175 = tpu.reciprocal %174 {approx = true} : vector<8x1xf32> -> vector<8x1xf32>
      %176 = vector.broadcast %175 : vector<8x1xf32> to vector<8x8xf32>
      %177 = arith.mulf %172, %176 : vector<8x8xf32>
      %c0_117 = arith.constant 0 : index
      %c24_118 = arith.constant 24 : index
      %178 = vector.load %arg17[%c0_117, %c24_118] : memref<8x32xf32, #tpu.memory_space<vmem>>, vector<8x8xf32>
      tpu.vector_store %arg17[%c0_117, %c24_118], %177 {strides = array<i32>} : memref<8x32xf32, #tpu.memory_space<vmem>>, vector<8x8xf32>,
      %c0_119 = arith.constant 0 : index
      %c0_120 = arith.constant 0 : index
      %179 = vector.load %arg17[%c0_119, %c0_120] : memref<8x32xf32, #tpu.memory_space<vmem>>, vector<8x32xf32>
      %180 = arith.truncf %179 : vector<8x32xf32> to vector<8x32xbf16>
      %c0_121 = arith.constant 0 : index
      %c0_122 = arith.constant 0 : index
      %181 = vector.load %arg9[%c0_121, %c0_122] : memref<32x32xbf16, #tpu.memory_space<vmem>>, vector<32x32xbf16>
      %cst_123 = arith.constant dense<0.000000e+00> : vector<8x32xf32>
      %182 = tpu.matmul %180, %181, %cst_123 {dimension_numbers = #tpu.dot_dimension_numbers<[1], [0], [0], [1], [0, 0, 1, 1], [], []>} : vector<8x32xbf16>, vector<32x32xbf16>, vector<8x32xf32> -> vector<8x32xf32>
      %c0_124 = arith.constant 0 : index
      %c0_125 = arith.constant 0 : index
      %183 = vector.load %arg10[%c0_124, %c0_125] : memref<1x32xf32, #tpu.memory_space<vmem>>, vector<1x32xf32>
      %184 = vector.broadcast %183 : vector<1x32xf32> to vector<8x32xf32>
      %185 = arith.addf %182, %184 : vector<8x32xf32>
      %c0_126 = arith.constant 0 : index
      %c0_127 = arith.constant 0 : index
      %c0_128 = arith.constant 0 : index
      %186 = vector.load %arg3[%c0_126, %c0_127, %c0_128] : memref<1x8x32xf32, #tpu.memory_space<vmem>>, vector<1x8x32xf32>
      %187 = vector.shape_cast %186 : vector<1x8x32xf32> to vector<8x32xf32>
      %188 = arith.addf %185, %187 : vector<8x32xf32>
      %cst_129 = arith.constant dense<0.000000e+00> : vector<8xf32>
      %189 = vector.multi_reduction <add>, %188, %cst_129 [1] : vector<8x32xf32> to vector<8xf32>
      %190 = vector.shape_cast %189 : vector<8xf32> to vector<8x1xf32>
      %cst_130 = arith.constant 3.200000e+01 : f32
      %191 = vector.broadcast %cst_130 : f32 to vector<8x1xf32>
      %192 = arith.divf %190, %191 : vector<8x1xf32>
      %193 = vector.broadcast %192 : vector<8x1xf32> to vector<8x32xf32>
      %194 = arith.subf %188, %193 : vector<8x32xf32>
      %195 = arith.mulf %194, %194 : vector<8x32xf32>
      %cst_131 = arith.constant dense<0.000000e+00> : vector<8xf32>
      %196 = vector.multi_reduction <add>, %195, %cst_131 [1] : vector<8x32xf32> to vector<8xf32>
      %197 = vector.shape_cast %196 : vector<8xf32> to vector<8x1xf32>
      %cst_132 = arith.constant 3.200000e+01 : f32
      %198 = vector.broadcast %cst_132 : f32 to vector<8x1xf32>
      %199 = arith.divf %197, %198 : vector<8x1xf32>
      %200 = vector.broadcast %192 : vector<8x1xf32> to vector<8x32xf32>
      %201 = arith.subf %188, %200 : vector<8x32xf32>
      %cst_133 = arith.constant 9.99999974E-6 : f32
      %202 = vector.broadcast %cst_133 : f32 to vector<8x1xf32>
      %203 = arith.addf %199, %202 : vector<8x1xf32>
      %204 = math.rsqrt %203 : vector<8x1xf32>
      %205 = vector.broadcast %204 : vector<8x1xf32> to vector<8x32xf32>
      %206 = arith.mulf %201, %205 : vector<8x32xf32>
      %c0_134 = arith.constant 0 : index
      %c0_135 = arith.constant 0 : index
      %207 = vector.load %arg11[%c0_134, %c0_135] : memref<1x32xf32, #tpu.memory_space<vmem>>, vector<1x32xf32>
      %208 = vector.broadcast %207 : vector<1x32xf32> to vector<8x32xf32>
      %209 = arith.mulf %206, %208 : vector<8x32xf32>
      %c0_136 = arith.constant 0 : index
      %c0_137 = arith.constant 0 : index
      %210 = vector.load %arg12[%c0_136, %c0_137] : memref<1x32xf32, #tpu.memory_space<vmem>>, vector<1x32xf32>
      %211 = vector.broadcast %210 : vector<1x32xf32> to vector<8x32xf32>
      %212 = arith.addf %209, %211 : vector<8x32xf32>
      %c0_138 = arith.constant 0 : index
      %c0_139 = arith.constant 0 : index
      %c0_140 = arith.constant 0 : index
      %213 = vector.load %arg13[%c0_138, %c0_139, %c0_140] : memref<1x8x32xf32, #tpu.memory_space<vmem>>, vector<1x8x32xf32>
      %214 = vector.shape_cast %213 : vector<1x8x32xf32> to vector<8x32xf32>
      %215 = vector.shape_cast %212 : vector<8x32xf32> to vector<1x8x32xf32>
      tpu.vector_store %arg13[%c0_138, %c0_139, %c0_140], %215 {strides = array<i32>} : memref<1x8x32xf32, #tpu.memory_space<vmem>>, vector<1x8x32xf32>,
    } else {
    }
    return
  }
  func.func @transform_0(%arg0: i32, %arg1: i32, %arg2: i32) -> (i32, i32, i32) {
    %c0_i32 = arith.constant 0 : i32
    %c0_i32_0 = arith.constant 0 : i32
    return %arg0, %arg1, %c0_i32 : i32, i32, i32
  }
  func.func @transform_1(%arg0: i32, %arg1: i32, %arg2: i32) -> (i32, i32, i32) {
    %c0_i32 = arith.constant 0 : i32
    %c0_i32_0 = arith.constant 0 : i32
    return %arg0, %arg2, %c0_i32 : i32, i32, i32
  }
  func.func @transform_2(%arg0: i32, %arg1: i32, %arg2: i32) -> (i32, i32) {
    %c0_i32 = arith.constant 0 : i32
    %c0_i32_0 = arith.constant 0 : i32
    %c0_i32_1 = arith.constant 0 : i32
    return %c0_i32, %c0_i32_0 : i32, i32
  }
  func.func @transform_3(%arg0: i32, %arg1: i32, %arg2: i32) -> (i32, i32) {
    %c0_i32 = arith.constant 0 : i32
    %c0_i32_0 = arith.constant 0 : i32
    %c0_i32_1 = arith.constant 0 : i32
    return %c0_i32, %c0_i32_0 : i32, i32
  }
  func.func @transform_4(%arg0: i32, %arg1: i32, %arg2: i32) -> (i32, i32) {
    %c0_i32 = arith.constant 0 : i32
    %c0_i32_0 = arith.constant 0 : i32
    %c0_i32_1 = arith.constant 0 : i32
    return %c0_i32, %c0_i32_0 : i32, i32
  }
  func.func @transform_5(%arg0: i32, %arg1: i32, %arg2: i32) -> (i32, i32) {
    %c0_i32 = arith.constant 0 : i32
    %c0_i32_0 = arith.constant 0 : i32
    %c0_i32_1 = arith.constant 0 : i32
    return %c0_i32, %c0_i32_0 : i32, i32
  }
  func.func @transform_6(%arg0: i32, %arg1: i32, %arg2: i32) -> (i32, i32) {
    %c0_i32 = arith.constant 0 : i32
    %c0_i32_0 = arith.constant 0 : i32
    %c0_i32_1 = arith.constant 0 : i32
    return %c0_i32, %c0_i32_0 : i32, i32
  }
  func.func @transform_7(%arg0: i32, %arg1: i32, %arg2: i32) -> (i32, i32) {
    %c0_i32 = arith.constant 0 : i32
    %c0_i32_0 = arith.constant 0 : i32
    %c0_i32_1 = arith.constant 0 : i32
    return %c0_i32, %c0_i32_0 : i32, i32
  }
  func.func @transform_8(%arg0: i32, %arg1: i32, %arg2: i32) -> (i32, i32) {
    %c0_i32 = arith.constant 0 : i32
    %c0_i32_0 = arith.constant 0 : i32
    %c0_i32_1 = arith.constant 0 : i32
    return %c0_i32, %c0_i32_0 : i32, i32
  }
  func.func @transform_9(%arg0: i32, %arg1: i32, %arg2: i32) -> (i32, i32) {
    %c0_i32 = arith.constant 0 : i32
    %c0_i32_0 = arith.constant 0 : i32
    %c0_i32_1 = arith.constant 0 : i32
    return %c0_i32, %c0_i32_0 : i32, i32
  }
  func.func @transform_10(%arg0: i32, %arg1: i32, %arg2: i32) -> (i32, i32, i32) {
    %c0_i32 = arith.constant 0 : i32
    %c0_i32_0 = arith.constant 0 : i32
    return %arg0, %arg1, %c0_i32 : i32, i32, i32
  }
}

</mosaic_0001>

<llo_original>
// kernel: tpu_custom_call.1
$region0: #{tpu_custom_call.1}
  #allocation0 [shape = 'u32[]', space=smem, size = 0x4, offset = 0x4, fixed_abs, tag = 'smem constant byte address 0x4 - core index']
  #allocation1 [shape = 'u32[144,128]{1,0:T(1,128)}', space=vmem, size = 0x12000, scoped, tag = 'internal scratch']
  #allocation2 [shape = 'bf16[8,32]{1,0:T(8,128)(2,1)}', space=vmem, size = 0x800, scoped, tag = 'scratch operand']
  #allocation3 [shape = 'f32[4,8,1]{2,1,0:T(8,128)}', space=vmem, size = 0x4000, scoped, tag = 'scratch operand']
  #allocation4 [shape = 'f32[4,8,1]{2,1,0:T(8,128)}', space=vmem, size = 0x4000, scoped, tag = 'scratch operand']
  #allocation5 [shape = 'f32[8,32]{1,0:T(8,128)}', space=vmem, size = 0x1000, scoped, tag = 'scratch operand']
  %s0 = inlined_call_operand.hbm [shape: f32[2,8,32], index: 0, kind: input, shape index: {}]
  %s1 = inlined_call_operand.hbm [shape: f32[2,8,32], index: 1, kind: input, shape index: {}]
  %s2 = inlined_call_operand.hbm [shape: bf16[32,32], index: 2, kind: input, shape index: {}]
  %s3 = inlined_call_operand.vmem [shape: f32[1,32], index: 3, kind: input, shape index: {}]
  %s4 = inlined_call_operand.hbm [shape: bf16[32,64], index: 4, kind: input, shape index: {}]
  %s5 = inlined_call_operand.vmem [shape: f32[1,64], index: 5, kind: input, shape index: {}]
  %s6 = inlined_call_operand.vmem [shape: bf16[32,32], index: 6, kind: input, shape index: {}]
  %s7 = inlined_call_operand.vmem [shape: f32[1,32], index: 7, kind: input, shape index: {}]
  %s8 = inlined_call_operand.vmem [shape: f32[1,32], index: 8, kind: input, shape index: {}]
  %s9 = inlined_call_operand.vmem [shape: f32[1,32], index: 9, kind: input, shape index: {}]
  %s10 = inlined_call_operand.hbm [shape: f32[2,8,32], index: 10, kind: output, shape index: {}]
  %s11 = sld [smem:[#allocation0]]
  $region97: #{tpu_custom_call.1} parent=0
    _
  %s13 = ssub.s32 1, %s11
  %s14 = scalar_select 0, %s13, %s11
  $region1: #{tpu_custom_call.1} parent=0
    #allocation6 [shape = 'u8[8192]{0}', space=vmem, size = 0x2000, scoped, tag = 'input window, operand 0']
    #allocation7 [shape = 's32[2]{0}', space=sflag, size = 0x8, scoped, tag = 'scoped memory for tpu_custom_call.1']
    #allocation8 [shape = 's32[2]{0}', space=sflag, size = 0x8, scoped, tag = 'scoped memory for tpu_custom_call.1']
    #allocation9 [shape = 'u8[8192]{0}', space=vmem, size = 0x2000, scoped, tag = 'input window, operand 1']
    #allocation10 [shape = 's32[2]{0}', space=sflag, size = 0x8, scoped, tag = 'scoped memory for tpu_custom_call.1']
    #allocation11 [shape = 'u8[8192]{0}', space=vmem, size = 0x2000, scoped, tag = 'input window, operand 2, single buffered']
    #allocation12 [shape = 'u8[8192]{0}', space=vmem, size = 0x2000, scoped, tag = 'input window, operand 4, single buffered']
    #allocation13 [shape = 's32[1]{0}', space=sflag, size = 0x4, scoped, tag = 'scoped memory for tpu_custom_call.1']
    #allocation14 [shape = 'u8[8192]{0}', space=vmem, size = 0x2000, scoped, tag = 'output window, operand 0']
    %15 = vsyncpa [#allocation7], 0
    %s16 = scalar_lea.sflag [#allocation7], 1
    %17 = vsyncpa %s16, 0
    %18 = vsyncpa [#allocation10], 0
    %s19 = scalar_lea.sflag [#allocation10], 1
    %20 = vsyncpa %s19, 0
    %21 = vsyncpa [#allocation13], 0
    %22 = vsyncpa [#allocation8], 0
    %s23 = scalar_lea.sflag [#allocation8], 1
    %24 = vsyncpa %s23, 0
    loop: start=0, step=1, limit=4
    $region2: #{tpu_custom_call.1} parent=1 // loop_pre_header
      _
    $region3: #{tpu_custom_call.1} parent=1 // loop_header
      %s26 = sphi 0, %s30
      %p27 = scmp.ge.s32.totalorder %s26, 4
      %s33 = sphi 0, %s52
      %s34 = sphi 0, %s48
      %s35 = sphi 0, %s44
      %s36 = sphi 0, %s33
      %s37 = sphi 0, %s34
      %s38 = sphi 0, %s35
      %s39 = sphi 0, %s36
      %s40 = sphi 0, %s37
      %s41 = sphi 0, %s38
      %s57 = sphi 0, %s59
      %s60 = sphi 0, %s57
      %s61 = sphi 0, %s60
      %s77 = sphi 0, %s61
      %s85 = sphi 0, %s87
      %s88 = sphi 0, %s85
      %s89 = sphi 0, %s88
      %s105 = sphi 0, %s89
      %s109 = sphi 0, %s109
      %s111 = sphi 0, %s109
      %s112 = sphi 0, %s111
      %s126 = sphi 0, %s112
      %s130 = sphi 0, %s130
      %s132 = sphi 0, %s130
      %s133 = sphi 0, %s132
      %s147 = sphi 0, %s133
      %s151 = sphi 0, %s151
      %s153 = sphi 0, %s151
      %s154 = sphi 0, %s153
      %s168 = sphi 0, %s154
      %s172 = sphi 0, %s172
      %s174 = sphi 0, %s172
      %s175 = sphi 0, %s174
      %s189 = sphi 0, %s175
      %s193 = sphi 0, %s193
      %s195 = sphi 0, %s193
      %s196 = sphi 0, %s195
      %s210 = sphi 0, %s196
      %s214 = sphi 0, %s214
      %s216 = sphi 0, %s214
      %s217 = sphi 0, %s216
      %s231 = sphi 0, %s217
      %s235 = sphi 0, %s235
      %s237 = sphi 0, %s235
      %s238 = sphi 0, %s237
      %s252 = sphi 0, %s238
      %s256 = sphi 0, %s256
      %s258 = sphi 0, %s256
      %s259 = sphi 0, %s258
      %s273 = sphi 0, %s259
      %s281 = sphi 0, %s283
      %s284 = sphi 0, %s281
      %s285 = sphi 0, %s284
      %s301 = sphi 0, %s285
    $region4: #{tpu_custom_call.1} parent=1 // loop_header_branch
      %29 = sbr.rel (%p27) target = $region8
    $region5: #{tpu_custom_call.1} parent=1 // loop_body
      %s31 = ssub.s32 %s26, 1
      %s32 = ssub.s32 %s26, 2
      %s42 = sadd.s32 1, %s35
      %p43 = scmp.ge.s32.totalorder %s42, 1
      %s44 = scalar_select %p43, 0, %s42
      %s45 = sadd.s32 1, %s34
      %s46 = scalar_select %p43, %s45, %s34
      %p47 = scmp.ge.s32.totalorder %s46, 1
      %s48 = scalar_select %p47, 0, %s46
      %s49 = sadd.s32 1, %s33
      %s50 = scalar_select %p47, %s49, %s33
      %p51 = scmp.ge.s32.totalorder %s50, 2
      %s52 = scalar_select %p51, 0, %s50
      %s53 = ssub.s32 %s33, %s52
      %s54 = ssub.s32 %s34, %s48
      %s55 = sor.u32 %s53, %s54
      %p56 = scmp.eq.s32.totalorder %s55, 0
      %s58 = sadd.s32 %s57, 1
      %s59 = scalar_select %p56, %s57, %s58
      %p62 = pneg %p56
      %p63 = scmp.eq.s32.totalorder %s26, 1
      %p64 = por %p62, %p63
      %p65 = scmp.ne.s32.totalorder %s57, %s60
      %p66 = scmp.eq.s32.totalorder %s26, 0
      %p67 = por %p65, %p66
      %p68 = scmp.ne.s32.totalorder %s57, %s60
      %p69 = scmp.eq.s32.totalorder %s31, 1
      %p70 = por %p68, %p69
      %p71 = scmp.ne.s32.totalorder %s60, %s61
      %p72 = scmp.eq.s32.totalorder %s31, 0
      %p73 = por %p71, %p72
      %p74 = scmp.ne.s32.totalorder %s60, %s61
      %p75 = scmp.eq.s32.totalorder %s32, 1
      %p76 = por %p74, %p75
      %p78 = scmp.ne.s32.totalorder %s61, %s77
      %p79 = scmp.eq.s32.totalorder %s32, 0
      %p80 = por %p78, %p79
      %s81 = ssub.s32 %s33, %s52
      %s82 = ssub.s32 %s35, %s44
      %s83 = sor.u32 %s81, %s82
      %p84 = scmp.eq.s32.totalorder %s83, 0
      %s86 = sadd.s32 %s85, 1
      %s87 = scalar_select %p84, %s85, %s86
      %p90 = pneg %p84
      %p91 = scmp.eq.s32.totalorder %s26, 1
      %p92 = por %p90, %p91
      %p93 = scmp.ne.s32.totalorder %s85, %s88
      %p94 = scmp.eq.s32.totalorder %s26, 0
      %p95 = por %p93, %p94
      %p96 = scmp.ne.s32.totalorder %s85, %s88
      %p97 = scmp.eq.s32.totalorder %s31, 1
      %p98 = por %p96, %p97
      %p99 = scmp.ne.s32.totalorder %s88, %s89
      %p100 = scmp.eq.s32.totalorder %s31, 0
      %p101 = por %p99, %p100
      %p102 = scmp.ne.s32.totalorder %s88, %s89
      %p103 = scmp.eq.s32.totalorder %s32, 1
      %p104 = por %p102, %p103
      %p106 = scmp.ne.s32.totalorder %s89, %s105
      %p107 = scmp.eq.s32.totalorder %s32, 0
      %p108 = por %p106, %p107
      %s110 = sadd.s32 %s109, 1
      %p113 = scmp.eq.s32.totalorder %s26, 1
      %p114 = scmp.ne.s32.totalorder %s109, %s111
      %p115 = scmp.eq.s32.totalorder %s26, 0
      %p116 = por %p114, %p115
      %p117 = scmp.ne.s32.totalorder %s109, %s111
      %p118 = scmp.eq.s32.totalorder %s31, 1
      %p119 = por %p117, %p118
      %p120 = scmp.ne.s32.totalorder %s111, %s112
      %p121 = scmp.eq.s32.totalorder %s31, 0
      %p122 = por %p120, %p121
      %p123 = scmp.ne.s32.totalorder %s111, %s112
      %p124 = scmp.eq.s32.totalorder %s32, 1
      %p125 = por %p123, %p124
      %p127 = scmp.ne.s32.totalorder %s112, %s126
      %p128 = scmp.eq.s32.totalorder %s32, 0
      %p129 = por %p127, %p128
      %s131 = sadd.s32 %s130, 1
      %p134 = scmp.eq.s32.totalorder %s26, 1
      %p135 = scmp.ne.s32.totalorder %s130, %s132
      %p136 = scmp.eq.s32.totalorder %s26, 0
      %p137 = por %p135, %p136
      %p138 = scmp.ne.s32.totalorder %s130, %s132
      %p139 = scmp.eq.s32.totalorder %s31, 1
      %p140 = por %p138, %p139
      %p141 = scmp.ne.s32.totalorder %s132, %s133
      %p142 = scmp.eq.s32.totalorder %s31, 0
      %p143 = por %p141, %p142
      %p144 = scmp.ne.s32.totalorder %s132, %s133
      %p145 = scmp.eq.s32.totalorder %s32, 1
      %p146 = por %p144, %p145
      %p148 = scmp.ne.s32.totalorder %s133, %s147
      %p149 = scmp.eq.s32.totalorder %s32, 0
      %p150 = por %p148, %p149
      %s152 = sadd.s32 %s151, 1
      %p155 = scmp.eq.s32.totalorder %s26, 1
      %p156 = scmp.ne.s32.totalorder %s151, %s153
      %p157 = scmp.eq.s32.totalorder %s26, 0
      %p158 = por %p156, %p157
      %p159 = scmp.ne.s32.totalorder %s151, %s153
      %p160 = scmp.eq.s32.totalorder %s31, 1
      %p161 = por %p159, %p160
      %p162 = scmp.ne.s32.totalorder %s153, %s154
      %p163 = scmp.eq.s32.totalorder %s31, 0
      %p164 = por %p162, %p163
      %p165 = scmp.ne.s32.totalorder %s153, %s154
      %p166 = scmp.eq.s32.totalorder %s32, 1
      %p167 = por %p165, %p166
      %p169 = scmp.ne.s32.totalorder %s154, %s168
      %p170 = scmp.eq.s32.totalorder %s32, 0
      %p171 = por %p169, %p170
      %s173 = sadd.s32 %s172, 1
      %p176 = scmp.eq.s32.totalorder %s26, 1
      %p177 = scmp.ne.s32.totalorder %s172, %s174
      %p178 = scmp.eq.s32.totalorder %s26, 0
      %p179 = por %p177, %p178
      %p180 = scmp.ne.s32.totalorder %s172, %s174
      %p181 = scmp.eq.s32.totalorder %s31, 1
      %p182 = por %p180, %p181
      %p183 = scmp.ne.s32.totalorder %s174, %s175
      %p184 = scmp.eq.s32.totalorder %s31, 0
      %p185 = por %p183, %p184
      %p186 = scmp.ne.s32.totalorder %s174, %s175
      %p187 = scmp.eq.s32.totalorder %s32, 1
      %p188 = por %p186, %p187
      %p190 = scmp.ne.s32.totalorder %s175, %s189
      %p191 = scmp.eq.s32.totalorder %s32, 0
      %p192 = por %p190, %p191
      %s194 = sadd.s32 %s193, 1
      %p197 = scmp.eq.s32.totalorder %s26, 1
      %p198 = scmp.ne.s32.totalorder %s193, %s195
      %p199 = scmp.eq.s32.totalorder %s26, 0
      %p200 = por %p198, %p199
      %p201 = scmp.ne.s32.totalorder %s193, %s195
      %p202 = scmp.eq.s32.totalorder %s31, 1
      %p203 = por %p201, %p202
      %p204 = scmp.ne.s32.totalorder %s195, %s196
      %p205 = scmp.eq.s32.totalorder %s31, 0
      %p206 = por %p204, %p205
      %p207 = scmp.ne.s32.totalorder %s195, %s196
      %p208 = scmp.eq.s32.totalorder %s32, 1
      %p209 = por %p207, %p208
      %p211 = scmp.ne.s32.totalorder %s196, %s210
      %p212 = scmp.eq.s32.totalorder %s32, 0
      %p213 = por %p211, %p212
      %s215 = sadd.s32 %s214, 1
      %p218 = scmp.eq.s32.totalorder %s26, 1
      %p219 = scmp.ne.s32.totalorder %s214, %s216
      %p220 = scmp.eq.s32.totalorder %s26, 0
      %p221 = por %p219, %p220
      %p222 = scmp.ne.s32.totalorder %s214, %s216
      %p223 = scmp.eq.s32.totalorder %s31, 1
      %p224 = por %p222, %p223
      %p225 = scmp.ne.s32.totalorder %s216, %s217
      %p226 = scmp.eq.s32.totalorder %s31, 0
      %p227 = por %p225, %p226
      %p228 = scmp.ne.s32.totalorder %s216, %s217
      %p229 = scmp.eq.s32.totalorder %s32, 1
      %p230 = por %p228, %p229
      %p232 = scmp.ne.s32.totalorder %s217, %s231
      %p233 = scmp.eq.s32.totalorder %s32, 0
      %p234 = por %p232, %p233
      %s236 = sadd.s32 %s235, 1
      %p239 = scmp.eq.s32.totalorder %s26, 1
      %p240 = scmp.ne.s32.totalorder %s235, %s237
      %p241 = scmp.eq.s32.totalorder %s26, 0
      %p242 = por %p240, %p241
      %p243 = scmp.ne.s32.totalorder %s235, %s237
      %p244 = scmp.eq.s32.totalorder %s31, 1
      %p245 = por %p243, %p244
      %p246 = scmp.ne.s32.totalorder %s237, %s238
      %p247 = scmp.eq.s32.totalorder %s31, 0
      %p248 = por %p246, %p247
      %p249 = scmp.ne.s32.totalorder %s237, %s238
      %p250 = scmp.eq.s32.totalorder %s32, 1
      %p251 = por %p249, %p250
      %p253 = scmp.ne.s32.totalorder %s238, %s252
      %p254 = scmp.eq.s32.totalorder %s32, 0
      %p255 = por %p253, %p254
      %s257 = sadd.s32 %s256, 1
      %p260 = scmp.eq.s32.totalorder %s26, 1
      %p261 = scmp.ne.s32.totalorder %s256, %s258
      %p262 = scmp.eq.s32.totalorder %s26, 0
      %p263 = por %p261, %p262
      %p264 = scmp.ne.s32.totalorder %s256, %s258
      %p265 = scmp.eq.s32.totalorder %s31, 1
      %p266 = por %p264, %p265
      %p267 = scmp.ne.s32.totalorder %s258, %s259
      %p268 = scmp.eq.s32.totalorder %s31, 0
      %p269 = por %p267, %p268
      %p270 = scmp.ne.s32.totalorder %s258, %s259
      %p271 = scmp.eq.s32.totalorder %s32, 1
      %p272 = por %p270, %p271
      %p274 = scmp.ne.s32.totalorder %s259, %s273
      %p275 = scmp.eq.s32.totalorder %s32, 0
      %p276 = por %p274, %p275
      %s277 = ssub.s32 %s33, %s52
      %s278 = ssub.s32 %s34, %s48
      %s279 = sor.u32 %s277, %s278
      %p280 = scmp.eq.s32.totalorder %s279, 0
      %s282 = sadd.s32 %s281, 1
      %s283 = scalar_select %p280, %s281, %s282
      %p286 = pneg %p280
      %p287 = scmp.eq.s32.totalorder %s26, 1
      %p288 = por %p286, %p287
      %p289 = scmp.ne.s32.totalorder %s281, %s284
      %p290 = scmp.eq.s32.totalorder %s26, 0
      %p291 = por %p289, %p290
      %p292 = scmp.ne.s32.totalorder %s281, %s284
      %p293 = scmp.eq.s32.totalorder %s31, 1
      %p294 = por %p292, %p293
      %p295 = scmp.ne.s32.totalorder %s284, %s285
      %p296 = scmp.eq.s32.totalorder %s31, 0
      %p297 = por %p295, %p296
      %p298 = scmp.ne.s32.totalorder %s284, %s285
      %p299 = scmp.eq.s32.totalorder %s32, 1
      %p300 = por %p298, %p299
      %p302 = scmp.ne.s32.totalorder %s285, %s301
      %p303 = scmp.eq.s32.totalorder %s32, 0
      %p304 = por %p302, %p303
      %p305 = scmp.le.s32.totalorder 1, %s26
      %p306 = scmp.lt.s32.totalorder %s26, 3
      %p307 = pnand %p305, %p306
      %p308 = pneg %p307
      // Predicated region
      $region9: #{tpu_custom_call.1} parent=5 // pred_check
        _
      $region10: #{tpu_custom_call.1} parent=5 // pred_check_branch
        %310 = sbr.rel (%p307) target = $region12
      $region11: #{tpu_custom_call.1} parent=5 // pred_region
        %s311 = ssub.s32 %s26, 1
        // Predicated region
        $region13: #{tpu_custom_call.1} parent=11 // pred_check
          %p312 = pneg %p122
        $region14: #{tpu_custom_call.1} parent=11 // pred_check_branch
          %314 = sbr.rel (%p312) target = $region16
        $region15: #{tpu_custom_call.1} parent=11 // pred_region
          %s316 = ssub.s32 256, 256
          %317 = vsyncadd [#allocation10], %s316
          %s318 = sshll.u32 [#allocation11], 4
          %s319 = int_to_ptr.vmem [resolvable:$true] %s318
          %324 = dma.hbm_to_vmem [thread:$0]  %s2, 256, %s319, [#allocation10], 64, 64, 4
        $region16: #{tpu_custom_call.1} parent=11 // pred_fallthru
          _
        // Predicated region
        $region17: #{tpu_custom_call.1} parent=11 // pred_check
          %p325 = pneg %p143
        $region18: #{tpu_custom_call.1} parent=11 // pred_check_branch
          %327 = sbr.rel (%p325) target = $region20
        $region19: #{tpu_custom_call.1} parent=11 // pred_region
          _
        $region20: #{tpu_custom_call.1} parent=11 // pred_fallthru
          _
        // Predicated region
        $region21: #{tpu_custom_call.1} parent=11 // pred_check
          %p328 = pneg %p164
        $region22: #{tpu_custom_call.1} parent=11 // pred_check_branch
          %330 = sbr.rel (%p328) target = $region24
        $region23: #{tpu_custom_call.1} parent=11 // pred_region
          %s332 = ssub.s32 256, 256
          %333 = vsyncadd [#allocation13], %s332
          %s334 = sshll.u32 [#allocation12], 4
          %s335 = int_to_ptr.vmem [resolvable:$true] %s334
          %340 = dma.hbm_to_vmem [thread:$0]  %s4, 256, %s335, [#allocation13], 64, 64, 4
        $region24: #{tpu_custom_call.1} parent=11 // pred_fallthru
          _
        // Predicated region
        $region25: #{tpu_custom_call.1} parent=11 // pred_check
          %p341 = pneg %p185
        $region26: #{tpu_custom_call.1} parent=11 // pred_check_branch
          %343 = sbr.rel (%p341) target = $region28
        $region27: #{tpu_custom_call.1} parent=11 // pred_region
          _
        $region28: #{tpu_custom_call.1} parent=11 // pred_fallthru
          _
        // Predicated region
        $region29: #{tpu_custom_call.1} parent=11 // pred_check
          %p344 = pneg %p206
        $region30: #{tpu_custom_call.1} parent=11 // pred_check_branch
          %346 = sbr.rel (%p344) target = $region32
        $region31: #{tpu_custom_call.1} parent=11 // pred_region
          _
        $region32: #{tpu_custom_call.1} parent=11 // pred_fallthru
          _
        // Predicated region
        $region33: #{tpu_custom_call.1} parent=11 // pred_check
          %p347 = pneg %p227
        $region34: #{tpu_custom_call.1} parent=11 // pred_check_branch
          %349 = sbr.rel (%p347) target = $region36
        $region35: #{tpu_custom_call.1} parent=11 // pred_region
          _
        $region36: #{tpu_custom_call.1} parent=11 // pred_fallthru
          _
        // Predicated region
        $region37: #{tpu_custom_call.1} parent=11 // pred_check
          %p350 = pneg %p248
        $region38: #{tpu_custom_call.1} parent=11 // pred_check_branch
          %352 = sbr.rel (%p350) target = $region40
        $region39: #{tpu_custom_call.1} parent=11 // pred_region
          _
        $region40: #{tpu_custom_call.1} parent=11 // pred_fallthru
          _
        // Predicated region
        $region41: #{tpu_custom_call.1} parent=11 // pred_check
          %p353 = pneg %p269
        $region42: #{tpu_custom_call.1} parent=11 // pred_check_branch
          %355 = sbr.rel (%p353) target = $region44
        $region43: #{tpu_custom_call.1} parent=11 // pred_region
          _
        $region44: #{tpu_custom_call.1} parent=11 // pred_fallthru
          _
      $region12: #{tpu_custom_call.1} parent=5 // pred_fallthru
        _
      %p356 = scmp.lt.s32.totalorder %s26, 2
      // Predicated region
      $region45: #{tpu_custom_call.1} parent=5 // pred_check
        %p357 = pneg %p356
      $region46: #{tpu_custom_call.1} parent=5 // pred_check_branch
        %359 = sbr.rel (%p357) target = $region48
      $region47: #{tpu_custom_call.1} parent=5 // pred_region
        // Predicated region
        $region49: #{tpu_custom_call.1} parent=47 // pred_check
          %p360 = pneg %p67
        $region50: #{tpu_custom_call.1} parent=47 // pred_check_branch
          %362 = sbr.rel (%p360) target = $region52
        $region51: #{tpu_custom_call.1} parent=47 // pred_region
          %s363 = sand.u32 %s57, 1
          %s364 = scalar_lea.sflag [#allocation7], %s363
          %s365 = sand.u32 %s57, 1
          %s366 = smul.addr %s365, 8
          %s367 = scalar_lea.vmem [#allocation6], %s366
          %s369 = ssub.s32 128, 128
          %370 = vsyncadd %s364, %s369
          %s371 = sadd.s32 %s34, %s33
          %s372 = smul.addr %s371, 128
          %s373 = scalar_lea.hbm %s0, %s372
          %s375 = sshll.u32 %s367, 4
          %s376 = int_to_ptr.vmem [resolvable:$true] %s375
          %378 = dma.hbm_to_vmem [thread:$0]  %s373, 128, %s376, %s364
        $region52: #{tpu_custom_call.1} parent=47 // pred_fallthru
          _
        // Predicated region
        $region53: #{tpu_custom_call.1} parent=47 // pred_check
          %p379 = pneg %p95
        $region54: #{tpu_custom_call.1} parent=47 // pred_check_branch
          %381 = sbr.rel (%p379) target = $region56
        $region55: #{tpu_custom_call.1} parent=47 // pred_region
          %s382 = sand.u32 %s26, 1
          %s383 = scalar_lea.sflag [#allocation10], %s382
          %s384 = sand.u32 %s85, 1
          %s385 = smul.addr %s384, 8
          %s386 = scalar_lea.vmem [#allocation9], %s385
          %s388 = ssub.s32 128, 128
          %389 = vsyncadd %s383, %s388
          %s390 = sadd.s32 %s35, %s33
          %s391 = smul.addr %s390, 128
          %s392 = scalar_lea.hbm %s1, %s391
          %s394 = sshll.u32 %s386, 4
          %s395 = int_to_ptr.vmem [resolvable:$true] %s394
          %397 = dma.hbm_to_vmem [thread:$0]  %s392, 128, %s395, %s383
        $region56: #{tpu_custom_call.1} parent=47 // pred_fallthru
          _
      $region48: #{tpu_custom_call.1} parent=5 // pred_fallthru
        _
      %p398 = scmp.le.s32.totalorder 1, %s26
      %p399 = scmp.lt.s32.totalorder %s26, 3
      %p400 = pnand %p398, %p399
      %p401 = pneg %p400
      // Predicated region
      $region57: #{tpu_custom_call.1} parent=5 // pred_check
        _
      $region58: #{tpu_custom_call.1} parent=5 // pred_check_branch
        %403 = sbr.rel (%p400) target = $region60
      $region59: #{tpu_custom_call.1} parent=5 // pred_region
        %s404 = ssub.s32 %s26, 1
        %s405 = sand.u32 %s60, 1
        %s406 = scalar_lea.sflag [#allocation7], %s405
        %s407 = sand.u32 %s60, 1
        %s408 = smul.addr %s407, 8
        %s409 = scalar_lea.vmem [#allocation6], %s408
        // Predicated region
        $region61: #{tpu_custom_call.1} parent=59 // pred_check
          %p410 = pneg %p73
        $region62: #{tpu_custom_call.1} parent=59 // pred_check_branch
          %412 = sbr.rel (%p410) target = $region64
        $region63: #{tpu_custom_call.1} parent=59 // pred_region
          %413 = dma.done %s406, 128
        $region64: #{tpu_custom_call.1} parent=59 // pred_fallthru
          _
        %s414 = sand.u32 %s31, 1
        %s415 = scalar_lea.sflag [#allocation10], %s414
        %s416 = sand.u32 %s88, 1
        %s417 = smul.addr %s416, 8
        %s418 = scalar_lea.vmem [#allocation9], %s417
        // Predicated region
        $region65: #{tpu_custom_call.1} parent=59 // pred_check
          %p419 = pneg %p101
        $region66: #{tpu_custom_call.1} parent=59 // pred_check_branch
          %421 = sbr.rel (%p419) target = $region68
        $region67: #{tpu_custom_call.1} parent=59 // pred_region
          %422 = dma.done %s415, 128
        $region68: #{tpu_custom_call.1} parent=59 // pred_fallthru
          _
        // Predicated region
        $region69: #{tpu_custom_call.1} parent=59 // pred_check
          %p423 = pneg %p122
        $region70: #{tpu_custom_call.1} parent=59 // pred_check_branch
          %425 = sbr.rel (%p423) target = $region72
        $region71: #{tpu_custom_call.1} parent=59 // pred_region
          %426 = dma.done [#allocation10], 256
        $region72: #{tpu_custom_call.1} parent=59 // pred_fallthru
          _
        // Predicated region
        $region73: #{tpu_custom_call.1} parent=59 // pred_check
          %p427 = pneg %p164
        $region74: #{tpu_custom_call.1} parent=59 // pred_check_branch
          %429 = sbr.rel (%p427) target = $region76
        $region75: #{tpu_custom_call.1} parent=59 // pred_region
          %430 = dma.done [#allocation13], 256
        $region76: #{tpu_custom_call.1} parent=59 // pred_fallthru
          _
        %s431 = sand.u32 %s60, 1
        %s432 = scalar_lea.sflag [#allocation7], %s431
        %s433 = sand.u32 %s60, 1
        %s434 = smul.addr %s433, 8
        %s435 = scalar_lea.vmem [#allocation6], %s434
        %p436 = pneg %p73
        %p437 = pneg %p70
        %s438 = sand.u32 %s31, 1
        %s439 = scalar_lea.sflag [#allocation10], %s438
        %s440 = sand.u32 %s88, 1
        %s441 = smul.addr %s440, 8
        %s442 = scalar_lea.vmem [#allocation9], %s441
        %p443 = pneg %p101
        %p444 = pneg %p98
        %p445 = pneg %p122
        %p446 = pneg %p119
        %p447 = pneg %p143
        %p448 = pneg %p140
        %p449 = pneg %p164
        %p450 = pneg %p161
        %p451 = pneg %p185
        %p452 = pneg %p182
        %p453 = pneg %p206
        %p454 = pneg %p203
        %p455 = pneg %p227
        %p456 = pneg %p224
        %p457 = pneg %p248
        %p458 = pneg %p245
        %p459 = pneg %p269
        %p460 = pneg %p266
        %p461 = pneg %p297
        %p462 = pneg %p294
        %s463 = sand.u32 %s284, 1
        %s464 = scalar_lea.sflag [#allocation8], %s463
        %s465 = sand.u32 %s284, 1
        %s466 = smul.addr %s465, 8
        %s467 = scalar_lea.vmem [#allocation14], %s466
        %p469 = scmp.eq.s32.totalorder %s38, 0
        // Predicated region
        $region77: #{tpu_custom_call.1} parent=59 // pred_check
          %p470 = pneg %p469
        $region78: #{tpu_custom_call.1} parent=59 // pred_check_branch
          %472 = sbr.rel (%p470) target = $region80
        $region79: #{tpu_custom_call.1} parent=59 // pred_region
          %v473 = vld [vmem:[%s409] sm:$0xff]
          %v474 = vpack.c.bf16 %v473, %v473
          %v475 = vld [vmem:[#allocation11] sm:$0xf]
          %v476 = vld [vmem:[#allocation11 + $0x4] sm:$0xf]
          %v477 = vld [vmem:[#allocation11 + $0x8] sm:$0xf]
          %v478 = vld [vmem:[#allocation11 + $0xc] sm:$0xf]
          %v479 = vld [vmem:[%s3] sm:$0x1]
          %v481 = vlaneseq
          %v482 = vshrl.u32 %v481, 7
          %v483 = vsub.s32 0, %v482
          %v484 = vrot.slane %v479, %v483
          %v490 = vunpack.c.l.b16 %v475
          %v491 = vunpack.c.l.b16 %v476
          %v492 = vunpack.c.l.b16 %v477
          %v493 = vunpack.c.l.b16 %v478
          %v494 = vpack.c.b16 %v491, %v490
          %v495 = vpack.c.b16 %v493, %v492
          %vm498 = vcmask 261120
          %v500 = vsel %vm498, %v474, 0
          %502 = vmatprep.subr.bf16.mxu0 0
          %503 = vmatpush1.bf16.msra.mxu0 %v494
          %504 = vmatprep.subr.bf16.mxu0 0
          %505 = vmatpush1.bf16.msra.mxu0 %v495
          %506 = vmatprep.subr.bf16.mxu0 0
          %507 = vmatpush1.bf16.msra.mxu0 0
          %508 = vmatprep.subr.bf16.mxu0 0
          %509 = vmatpush1.bf16.msra.mxu0 0
          %510 = vmatprep.subr.bf16.mxu0 0
          %511 = vmatpush1.bf16.msra.mxu0 0
          %512 = vmatprep.subr.bf16.mxu0 0
          %513 = vmatpush1.bf16.msra.mxu0 0
          %514 = vmatprep.subr.bf16.mxu0 0
          %515 = vmatpush1.bf16.msra.mxu0 0
          %516 = vmatprep.subr.bf16.mxu0 0
          %517 = vmatpush1.bf16.msra.mxu0 0
          %518 = vmatprep.subr.bf16.mxu0 0
          %519 = vmatpush1.bf16.msra.mxu0 0
          %520 = vmatprep.subr.bf16.mxu0 0
          %521 = vmatpush1.bf16.msra.mxu0 0
          %522 = vmatprep.subr.bf16.mxu0 0
          %523 = vmatpush1.bf16.msra.mxu0 0
          %524 = vmatprep.subr.bf16.mxu0 0
          %525 = vmatpush1.bf16.msra.mxu0 0
          %526 = vmatprep.subr.bf16.mxu0 0
          %527 = vmatpush1.bf16.msra.mxu0 0
          %528 = vmatprep.subr.bf16.mxu0 0
          %529 = vmatpush1.bf16.msra.mxu0 0
          %530 = vmatprep.subr.bf16.mxu0 0
          %531 = vmatpush1.bf16.msra.mxu0 0
          %532 = vmatprep.subr.bf16.mxu0 0
          %533 = vmatpush1.bf16.msra.mxu0 0
          %534 = vmatprep.mubr.bf16.mxu0 0
          %535 = vmatmul.mubr.bf16.gmra.mrb[0].mxu0 %v500
          %v536 = vpop.f32.mrb[0].mxu0
          %v537 = vadd.f32 %v484, %v536
          %v538 = vpop.f32.mrb[0].mxu0
          %v539 = vpop.f32.mrb[0].mxu0
          %v540 = vpop.f32.mrb[0].mxu0
          %541 = vdwg.mxu0
          %v542 = vpack.c.bf16 %v537, %v537
          %vm543 = vcmask 257024
          %544 = vst.msk [vmem:[#allocation2] sm:$0xf] %vm543, %v542
          %vm545 = vcmask 7168
          %546 = vst.msk [vmem:[#allocation3] sm:$0xff] %vm545, -inf
          %547 = vst.msk [vmem:[#allocation3 + $0x8] sm:$0xff] %vm545, -inf
          %548 = vst.msk [vmem:[#allocation3 + $0x10] sm:$0xff] %vm545, -inf
          %549 = vst.msk [vmem:[#allocation3 + $0x18] sm:$0xff] %vm545, -inf
          %550 = vst.msk [vmem:[#allocation4] sm:$0xff] %vm545, 0.0
          %551 = vst.msk [vmem:[#allocation4 + $0x8] sm:$0xff] %vm545, 0.0
          %552 = vst.msk [vmem:[#allocation4 + $0x10] sm:$0xff] %vm545, 0.0
          %553 = vst.msk [vmem:[#allocation4 + $0x18] sm:$0xff] %vm545, 0.0
          %554 = vst.msk [vmem:[#allocation5] sm:$0xff] %vm498, 0.0
        $region80: #{tpu_custom_call.1} parent=59 // pred_fallthru
          _
        %v555 = vld [vmem:[%s418] sm:$0xff]
        %v556 = vpack.c.bf16 %v555, %v555
        %v557 = vld [vmem:[#allocation12] sm:$0xf]
        %v558 = vld [vmem:[#allocation12 + $0x4] sm:$0xf]
        %v559 = vld [vmem:[#allocation12 + $0x8] sm:$0xf]
        %v560 = vld [vmem:[#allocation12 + $0xc] sm:$0xf]
        %v561 = vld [vmem:[%s5] sm:$0x1]
        %v563 = vlaneseq
        %v564 = vshrl.u32 %v563, 7
        %v565 = vsub.s32 0, %v564
        %v566 = vrot.slane %v561, %v565
        %v572 = vunpack.c.l.b16 %v557
        %v573 = vunpack.c.l.b16 %v558
        %v574 = vunpack.c.l.b16 %v559
        %v575 = vunpack.c.l.b16 %v560
        %v576 = vpack.c.b16 %v573, %v572
        %v577 = vpack.c.b16 %v575, %v574
        %vm580 = vcmask 261120
        %v582 = vsel %vm580, %v556, 0
        %584 = vmatprep.subr.bf16.mxu0 0
        %585 = vmatpush1.bf16.msra.mxu0 %v576
        %586 = vmatprep.subr.bf16.mxu0 0
        %587 = vmatpush1.bf16.msra.mxu0 %v577
        %588 = vmatprep.subr.bf16.mxu0 0
        %589 = vmatpush1.bf16.msra.mxu0 0
        %590 = vmatprep.subr.bf16.mxu0 0
        %591 = vmatpush1.bf16.msra.mxu0 0
        %592 = vmatprep.subr.bf16.mxu0 0
        %593 = vmatpush1.bf16.msra.mxu0 0
        %594 = vmatprep.subr.bf16.mxu0 0
        %595 = vmatpush1.bf16.msra.mxu0 0
        %596 = vmatprep.subr.bf16.mxu0 0
        %597 = vmatpush1.bf16.msra.mxu0 0
        %598 = vmatprep.subr.bf16.mxu0 0
        %599 = vmatpush1.bf16.msra.mxu0 0
        %600 = vmatprep.subr.bf16.mxu0 0
        %601 = vmatpush1.bf16.msra.mxu0 0
        %602 = vmatprep.subr.bf16.mxu0 0
        %603 = vmatpush1.bf16.msra.mxu0 0
        %604 = vmatprep.subr.bf16.mxu0 0
        %605 = vmatpush1.bf16.msra.mxu0 0
        %606 = vmatprep.subr.bf16.mxu0 0
        %607 = vmatpush1.bf16.msra.mxu0 0
        %608 = vmatprep.subr.bf16.mxu0 0
        %609 = vmatpush1.bf16.msra.mxu0 0
        %610 = vmatprep.subr.bf16.mxu0 0
        %611 = vmatpush1.bf16.msra.mxu0 0
        %612 = vmatprep.subr.bf16.mxu0 0
        %613 = vmatpush1.bf16.msra.mxu0 0
        %614 = vmatprep.subr.bf16.mxu0 0
        %615 = vmatpush1.bf16.msra.mxu0 0
        %616 = vmatprep.mubr.bf16.mxu0 0
        %617 = vmatmul.mubr.bf16.gmra.mrb[0].mxu0 %v582
        %v618 = vpop.f32.mrb[0].mxu0
        %v619 = vadd.f32 %v566, %v618
        %v620 = vpop.f32.mrb[0].mxu0
        %v621 = vpop.f32.mrb[0].mxu0
        %v622 = vpop.f32.mrb[0].mxu0
        %623 = vdwg.mxu0
        %v624 = vpack.c.bf16 %v619, %v619
        %v625 = vld [vmem:[#allocation2] sm:$0xf]
        %vm626 = vcmask 64512
        %v628 = vsel %vm626, %v625, 0
        %v631 = vsel %vm626, %v624, 0
        %633 = vmatprep.subr.bf16.mxu0 0
        %634 = vmatpush1.bf16.xpose.msra.mxu0 %v631
        %635 = vmatprep.subr.bf16.mxu0 0
        %636 = vmatpush1.bf16.xpose.msra.mxu0 0
        %637 = vmatprep.subr.bf16.mxu0 0
        %638 = vmatpush1.bf16.xpose.msra.mxu0 0
        %639 = vmatprep.subr.bf16.mxu0 0
        %640 = vmatpush1.bf16.xpose.msra.mxu0 0
        %641 = vmatprep.subr.bf16.mxu0 0
        %642 = vmatpush1.bf16.xpose.msra.mxu0 0
        %643 = vmatprep.subr.bf16.mxu0 0
        %644 = vmatpush1.bf16.xpose.msra.mxu0 0
        %645 = vmatprep.subr.bf16.mxu0 0
        %646 = vmatpush1.bf16.xpose.msra.mxu0 0
        %647 = vmatprep.subr.bf16.mxu0 0
        %648 = vmatpush1.bf16.xpose.msra.mxu0 0
        %649 = vmatprep.subr.bf16.mxu0 0
        %650 = vmatpush1.bf16.xpose.msra.mxu0 0
        %651 = vmatprep.subr.bf16.mxu0 0
        %652 = vmatpush1.bf16.xpose.msra.mxu0 0
        %653 = vmatprep.subr.bf16.mxu0 0
        %654 = vmatpush1.bf16.xpose.msra.mxu0 0
        %655 = vmatprep.subr.bf16.mxu0 0
        %656 = vmatpush1.bf16.xpose.msra.mxu0 0
        %657 = vmatprep.subr.bf16.mxu0 0
        %658 = vmatpush1.bf16.xpose.msra.mxu0 0
        %659 = vmatprep.subr.bf16.mxu0 0
        %660 = vmatpush1.bf16.xpose.msra.mxu0 0
        %661 = vmatprep.subr.bf16.mxu0 0
        %662 = vmatpush1.bf16.xpose.msra.mxu0 0
        %663 = vmatprep.subr.bf16.mxu0 0
        %664 = vmatpush1.bf16.xpose.msra.mxu0 0
        %665 = vmatprep.mubr.bf16.mxu0 0
        %666 = vmatmul.mubr.bf16.gmra.mrb[0].mxu0 %v628
        %v667 = vpop.f32.mrb[0].mxu0
        %v668 = vadd.f32 0.0, %v667
        %v669 = vpop.f32.mrb[0].mxu0
        %v670 = vpop.f32.mrb[0].mxu0
        %v671 = vpop.f32.mrb[0].mxu0
        %672 = vdwg.mxu0
        %v673 = vld [vmem:[#allocation3] sm:$0xff]
        %v674 = vld [vmem:[#allocation4] sm:$0xff]
        %v675 = vsel %vm626, %v668, -inf
        %676 = vmax.xlane.f32.xlu0 %v675
        %v677 = vpop.xlane.xlu0 %676
        %v678 = vmax.f32 %v673, %v677
        %v679 = vsub.f32 %v673, %v678
        %v680 = vmul.f32 %v679, 1.442695
        %v681 = vpow.pop %v680
        %683 = vset.pattern.permute.xlu0 0
        %684 = vperm.xlu0 %683, %v678
        %v685 = vpop.permute.xlu0 %684
        %v687 = vsub.f32 %v668, %v685
        %v688 = vpack.c.bf16 %v687, %v687
        %v690 = vmul.bf16 %v688, 1069105081
        %v691 = vpow.bf16.pop %v690
        %v692 = vmul.f32 %v681, %v674
        %v693 = vunpack.c.l.bf16 %v691
        %v694 = vsel %vm626, %v693, 0.0
        %695 = vadd.xlane.f32.xlu0 %v694
        %v696 = vpop.xlane.xlu0 %695
        %v697 = vadd.f32 %v692, %v696
        %vm698 = vcmask 7168
        %699 = vst.msk [vmem:[#allocation4] sm:$0xff] %vm698, %v697
        %700 = vst.msk [vmem:[#allocation3] sm:$0xff] %vm698, %v678
        %702 = vrot.lane.b32.xlu0 %v624, 96
        %v703 = vpop.permute.xlu0 %702
        %v705 = vsel %vm626, %v691, 0
        %vm707 = vcmask 1043456
        %v709 = vsel %vm707, %v703, 0
        %711 = vmatprep.subr.bf16.mxu0 0
        %712 = vmatpush1.bf16.msra.mxu0 %v709
        %713 = vmatprep.subr.bf16.mxu0 0
        %714 = vmatpush1.bf16.msra.mxu0 0
        %715 = vmatprep.subr.bf16.mxu0 0
        %716 = vmatpush1.bf16.msra.mxu0 0
        %717 = vmatprep.subr.bf16.mxu0 0
        %718 = vmatpush1.bf16.msra.mxu0 0
        %719 = vmatprep.subr.bf16.mxu0 0
        %720 = vmatpush1.bf16.msra.mxu0 0
        %721 = vmatprep.subr.bf16.mxu0 0
        %722 = vmatpush1.bf16.msra.mxu0 0
        %723 = vmatprep.subr.bf16.mxu0 0
        %724 = vmatpush1.bf16.msra.mxu0 0
        %725 = vmatprep.subr.bf16.mxu0 0
        %726 = vmatpush1.bf16.msra.mxu0 0
        %727 = vmatprep.subr.bf16.mxu0 0
        %728 = vmatpush1.bf16.msra.mxu0 0
        %729 = vmatprep.subr.bf16.mxu0 0
        %730 = vmatpush1.bf16.msra.mxu0 0
        %731 = vmatprep.subr.bf16.mxu0 0
        %732 = vmatpush1.bf16.msra.mxu0 0
        %733 = vmatprep.subr.bf16.mxu0 0
        %734 = vmatpush1.bf16.msra.mxu0 0
        %735 = vmatprep.subr.bf16.mxu0 0
        %736 = vmatpush1.bf16.msra.mxu0 0
        %737 = vmatprep.subr.bf16.mxu0 0
        %738 = vmatpush1.bf16.msra.mxu0 0
        %739 = vmatprep.subr.bf16.mxu0 0
        %740 = vmatpush1.bf16.msra.mxu0 0
        %741 = vmatprep.subr.bf16.mxu0 0
        %742 = vmatpush1.bf16.msra.mxu0 0
        %743 = vmatprep.mubr.bf16.mxu0 0
        %744 = vmatmul.mubr.bf16.gmra.mrb[0].mxu0 %v705
        %v745 = vpop.f32.mrb[0].mxu0
        %v746 = vadd.f32 0.0, %v745
        %v747 = vpop.f32.mrb[0].mxu0
        %v748 = vpop.f32.mrb[0].mxu0
        %v749 = vpop.f32.mrb[0].mxu0
        %750 = vdwg.mxu0
        %v751 = vld [vmem:[#allocation5] sm:$0xff]
        %753 = vset.pattern.permute.xlu0 0
        %754 = vperm.xlu0 %753, %v681
        %v755 = vpop.permute.xlu0 %754
        %v757 = vmul.f32 %v755, %v751
        %v758 = vadd.f32 %v757, %v746
        %759 = vst.msk [vmem:[#allocation5] sm:$0xff] %vm626, %v758
        %v760 = vld [vmem:[#allocation2] sm:$0xf]
        %v762 = vunpack.c.l.b16 %v760
        %v763 = vpack.c.b16 %v762, %v762
        %764 = vrot.lane.b32.xlu0 %v763, 120
        %v765 = vpop.permute.xlu0 %764
        %766 = vrot.lane.b32.xlu0 %v624, 120
        %v767 = vpop.permute.xlu0 %766
        %v769 = vsel %vm626, %v765, 0
        %v772 = vsel %vm626, %v767, 0
        %774 = vmatprep.subr.bf16.mxu0 0
        %775 = vmatpush1.bf16.xpose.msra.mxu0 %v772
        %776 = vmatprep.subr.bf16.mxu0 0
        %777 = vmatpush1.bf16.xpose.msra.mxu0 0
        %778 = vmatprep.subr.bf16.mxu0 0
        %779 = vmatpush1.bf16.xpose.msra.mxu0 0
        %780 = vmatprep.subr.bf16.mxu0 0
        %781 = vmatpush1.bf16.xpose.msra.mxu0 0
        %782 = vmatprep.subr.bf16.mxu0 0
        %783 = vmatpush1.bf16.xpose.msra.mxu0 0
        %784 = vmatprep.subr.bf16.mxu0 0
        %785 = vmatpush1.bf16.xpose.msra.mxu0 0
        %786 = vmatprep.subr.bf16.mxu0 0
        %787 = vmatpush1.bf16.xpose.msra.mxu0 0
        %788 = vmatprep.subr.bf16.mxu0 0
        %789 = vmatpush1.bf16.xpose.msra.mxu0 0
        %790 = vmatprep.subr.bf16.mxu0 0
        %791 = vmatpush1.bf16.xpose.msra.mxu0 0
        %792 = vmatprep.subr.bf16.mxu0 0
        %793 = vmatpush1.bf16.xpose.msra.mxu0 0
        %794 = vmatprep.subr.bf16.mxu0 0
        %795 = vmatpush1.bf16.xpose.msra.mxu0 0
        %796 = vmatprep.subr.bf16.mxu0 0
        %797 = vmatpush1.bf16.xpose.msra.mxu0 0
        %798 = vmatprep.subr.bf16.mxu0 0
        %799 = vmatpush1.bf16.xpose.msra.mxu0 0
        %800 = vmatprep.subr.bf16.mxu0 0
        %801 = vmatpush1.bf16.xpose.msra.mxu0 0
        %802 = vmatprep.subr.bf16.mxu0 0
        %803 = vmatpush1.bf16.xpose.msra.mxu0 0
        %804 = vmatprep.subr.bf16.mxu0 0
        %805 = vmatpush1.bf16.xpose.msra.mxu0 0
        %806 = vmatprep.mubr.bf16.mxu0 0
        %807 = vmatmul.mubr.bf16.gmra.mrb[0].mxu0 %v769
        %v808 = vpop.f32.mrb[0].mxu0
        %v809 = vadd.f32 0.0, %v808
        %v810 = vpop.f32.mrb[0].mxu0
        %v811 = vpop.f32.mrb[0].mxu0
        %v812 = vpop.f32.mrb[0].mxu0
        %813 = vdwg.mxu0
        %s814 = scalar_lea.vmem [#allocation3], 8
        %v815 = vld [vmem:[%s814] sm:$0xff]
        %s816 = scalar_lea.vmem [#allocation4], 8
        %v817 = vld [vmem:[%s816] sm:$0xff]
        %v818 = vsel %vm626, %v809, -inf
        %819 = vmax.xlane.f32.xlu0 %v818
        %v820 = vpop.xlane.xlu0 %819
        %v821 = vmax.f32 %v815, %v820
        %v822 = vsub.f32 %v815, %v821
        %v823 = vmul.f32 %v822, 1.442695
        %v824 = vpow.pop %v823
        %826 = vset.pattern.permute.xlu0 0
        %827 = vperm.xlu0 %826, %v821
        %v828 = vpop.permute.xlu0 %827
        %v830 = vsub.f32 %v809, %v828
        %v831 = vpack.c.bf16 %v830, %v830
        %v833 = vmul.bf16 %v831, 1069105081
        %v834 = vpow.bf16.pop %v833
        %v835 = vmul.f32 %v824, %v817
        %v836 = vunpack.c.l.bf16 %v834
        %v837 = vsel %vm626, %v836, 0.0
        %838 = vadd.xlane.f32.xlu0 %v837
        %v839 = vpop.xlane.xlu0 %838
        %v840 = vadd.f32 %v835, %v839
        %841 = vst.msk [vmem:[%s816] sm:$0xff] %vm698, %v840
        %842 = vst.msk [vmem:[%s814] sm:$0xff] %vm698, %v821
        %843 = vrot.lane.b32.xlu0 %v624, 88
        %v844 = vpop.permute.xlu0 %843
        %v846 = vsel %vm626, %v834, 0
        %v849 = vsel %vm707, %v844, 0
        %851 = vmatprep.subr.bf16.mxu0 0
        %852 = vmatpush1.bf16.msra.mxu0 %v849
        %853 = vmatprep.subr.bf16.mxu0 0
        %854 = vmatpush1.bf16.msra.mxu0 0
        %855 = vmatprep.subr.bf16.mxu0 0
        %856 = vmatpush1.bf16.msra.mxu0 0
        %857 = vmatprep.subr.bf16.mxu0 0
        %858 = vmatpush1.bf16.msra.mxu0 0
        %859 = vmatprep.subr.bf16.mxu0 0
        %860 = vmatpush1.bf16.msra.mxu0 0
        %861 = vmatprep.subr.bf16.mxu0 0
        %862 = vmatpush1.bf16.msra.mxu0 0
        %863 = vmatprep.subr.bf16.mxu0 0
        %864 = vmatpush1.bf16.msra.mxu0 0
        %865 = vmatprep.subr.bf16.mxu0 0
        %866 = vmatpush1.bf16.msra.mxu0 0
        %867 = vmatprep.subr.bf16.mxu0 0
        %868 = vmatpush1.bf16.msra.mxu0 0
        %869 = vmatprep.subr.bf16.mxu0 0
        %870 = vmatpush1.bf16.msra.mxu0 0
        %871 = vmatprep.subr.bf16.mxu0 0
        %872 = vmatpush1.bf16.msra.mxu0 0
        %873 = vmatprep.subr.bf16.mxu0 0
        %874 = vmatpush1.bf16.msra.mxu0 0
        %875 = vmatprep.subr.bf16.mxu0 0
        %876 = vmatpush1.bf16.msra.mxu0 0
        %877 = vmatprep.subr.bf16.mxu0 0
        %878 = vmatpush1.bf16.msra.mxu0 0
        %879 = vmatprep.subr.bf16.mxu0 0
        %880 = vmatpush1.bf16.msra.mxu0 0
        %881 = vmatprep.subr.bf16.mxu0 0
        %882 = vmatpush1.bf16.msra.mxu0 0
        %883 = vmatprep.mubr.bf16.mxu0 0
        %884 = vmatmul.mubr.bf16.gmra.mrb[0].mxu0 %v846
        %v885 = vpop.f32.mrb[0].mxu0
        %v886 = vadd.f32 0.0, %v885
        %v887 = vpop.f32.mrb[0].mxu0
        %v888 = vpop.f32.mrb[0].mxu0
        %v889 = vpop.f32.mrb[0].mxu0
        %890 = vdwg.mxu0
        %v891 = vld [vmem:[#allocation5] sm:$0xff]
        %893 = vset.pattern.permute.xlu0 0
        %894 = vperm.xlu0 %893, %v824
        %v895 = vpop.permute.xlu0 %894
        %v897 = vmul.f32 %v895, %v891
        %899 = vrot.lane.b32.xlu0 %v886, 8
        %v900 = vpop.permute.xlu0 %899
        %v902 = vadd.f32 %v897, %v900
        %vm903 = vcmask 130112
        %904 = vst.msk [vmem:[#allocation5] sm:$0xff] %vm903, %v902
        %v905 = vld [vmem:[#allocation2] sm:$0xf]
        %v907 = vunpack.c.l.b16 %v905
        %v908 = vpack.c.b16 %v907, %v907
        %909 = vrot.lane.b32.xlu0 %v908, 112
        %v910 = vpop.permute.xlu0 %909
        %911 = vrot.lane.b32.xlu0 %v624, 112
        %v912 = vpop.permute.xlu0 %911
        %v914 = vsel %vm626, %v910, 0
        %v917 = vsel %vm626, %v912, 0
        %919 = vmatprep.subr.bf16.mxu0 0
        %920 = vmatpush1.bf16.xpose.msra.mxu0 %v917
        %921 = vmatprep.subr.bf16.mxu0 0
        %922 = vmatpush1.bf16.xpose.msra.mxu0 0
        %923 = vmatprep.subr.bf16.mxu0 0
        %924 = vmatpush1.bf16.xpose.msra.mxu0 0
        %925 = vmatprep.subr.bf16.mxu0 0
        %926 = vmatpush1.bf16.xpose.msra.mxu0 0
        %927 = vmatprep.subr.bf16.mxu0 0
        %928 = vmatpush1.bf16.xpose.msra.mxu0 0
        %929 = vmatprep.subr.bf16.mxu0 0
        %930 = vmatpush1.bf16.xpose.msra.mxu0 0
        %931 = vmatprep.subr.bf16.mxu0 0
        %932 = vmatpush1.bf16.xpose.msra.mxu0 0
        %933 = vmatprep.subr.bf16.mxu0 0
        %934 = vmatpush1.bf16.xpose.msra.mxu0 0
        %935 = vmatprep.subr.bf16.mxu0 0
        %936 = vmatpush1.bf16.xpose.msra.mxu0 0
        %937 = vmatprep.subr.bf16.mxu0 0
        %938 = vmatpush1.bf16.xpose.msra.mxu0 0
        %939 = vmatprep.subr.bf16.mxu0 0
        %940 = vmatpush1.bf16.xpose.msra.mxu0 0
        %941 = vmatprep.subr.bf16.mxu0 0
        %942 = vmatpush1.bf16.xpose.msra.mxu0 0
        %943 = vmatprep.subr.bf16.mxu0 0
        %944 = vmatpush1.bf16.xpose.msra.mxu0 0
        %945 = vmatprep.subr.bf16.mxu0 0
        %946 = vmatpush1.bf16.xpose.msra.mxu0 0
        %947 = vmatprep.subr.bf16.mxu0 0
        %948 = vmatpush1.bf16.xpose.msra.mxu0 0
        %949 = vmatprep.subr.bf16.mxu0 0
        %950 = vmatpush1.bf16.xpose.msra.mxu0 0
        %951 = vmatprep.mubr.bf16.mxu0 0
        %952 = vmatmul.mubr.bf16.gmra.mrb[0].mxu0 %v914
        %v953 = vpop.f32.mrb[0].mxu0
        %v954 = vadd.f32 0.0, %v953
        %v955 = vpop.f32.mrb[0].mxu0
        %v956 = vpop.f32.mrb[0].mxu0
        %v957 = vpop.f32.mrb[0].mxu0
        %958 = vdwg.mxu0
        %s959 = scalar_lea.vmem [#allocation3], 16
        %v960 = vld [vmem:[%s959] sm:$0xff]
        %s961 = scalar_lea.vmem [#allocation4], 16
        %v962 = vld [vmem:[%s961] sm:$0xff]
        %v963 = vsel %vm626, %v954, -inf
        %964 = vmax.xlane.f32.xlu0 %v963
        %v965 = vpop.xlane.xlu0 %964
        %v966 = vmax.f32 %v960, %v965
        %v967 = vsub.f32 %v960, %v966
        %v968 = vmul.f32 %v967, 1.442695
        %v969 = vpow.pop %v968
        %971 = vset.pattern.permute.xlu0 0
        %972 = vperm.xlu0 %971, %v966
        %v973 = vpop.permute.xlu0 %972
        %v975 = vsub.f32 %v954, %v973
        %v976 = vpack.c.bf16 %v975, %v975
        %v978 = vmul.bf16 %v976, 1069105081
        %v979 = vpow.bf16.pop %v978
        %v980 = vmul.f32 %v969, %v962
        %v981 = vunpack.c.l.bf16 %v979
        %v982 = vsel %vm626, %v981, 0.0
        %983 = vadd.xlane.f32.xlu0 %v982
        %v984 = vpop.xlane.xlu0 %983
        %v985 = vadd.f32 %v980, %v984
        %986 = vst.msk [vmem:[%s961] sm:$0xff] %vm698, %v985
        %987 = vst.msk [vmem:[%s959] sm:$0xff] %vm698, %v966
        %988 = vrot.lane.b32.xlu0 %v624, 80
        %v989 = vpop.permute.xlu0 %988
        %v991 = vsel %vm626, %v979, 0
        %v994 = vsel %vm707, %v989, 0
        %996 = vmatprep.subr.bf16.mxu0 0
        %997 = vmatpush1.bf16.msra.mxu0 %v994
        %998 = vmatprep.subr.bf16.mxu0 0
        %999 = vmatpush1.bf16.msra.mxu0 0
        %1000 = vmatprep.subr.bf16.mxu0 0
        %1001 = vmatpush1.bf16.msra.mxu0 0
        %1002 = vmatprep.subr.bf16.mxu0 0
        %1003 = vmatpush1.bf16.msra.mxu0 0
        %1004 = vmatprep.subr.bf16.mxu0 0
        %1005 = vmatpush1.bf16.msra.mxu0 0
        %1006 = vmatprep.subr.bf16.mxu0 0
        %1007 = vmatpush1.bf16.msra.mxu0 0
        %1008 = vmatprep.subr.bf16.mxu0 0
        %1009 = vmatpush1.bf16.msra.mxu0 0
        %1010 = vmatprep.subr.bf16.mxu0 0
        %1011 = vmatpush1.bf16.msra.mxu0 0
        %1012 = vmatprep.subr.bf16.mxu0 0
        %1013 = vmatpush1.bf16.msra.mxu0 0
        %1014 = vmatprep.subr.bf16.mxu0 0
        %1015 = vmatpush1.bf16.msra.mxu0 0
        %1016 = vmatprep.subr.bf16.mxu0 0
        %1017 = vmatpush1.bf16.msra.mxu0 0
        %1018 = vmatprep.subr.bf16.mxu0 0
        %1019 = vmatpush1.bf16.msra.mxu0 0
        %1020 = vmatprep.subr.bf16.mxu0 0
        %1021 = vmatpush1.bf16.msra.mxu0 0
        %1022 = vmatprep.subr.bf16.mxu0 0
        %1023 = vmatpush1.bf16.msra.mxu0 0
        %1024 = vmatprep.subr.bf16.mxu0 0
        %1025 = vmatpush1.bf16.msra.mxu0 0
        %1026 = vmatprep.subr.bf16.mxu0 0
        %1027 = vmatpush1.bf16.msra.mxu0 0
        %1028 = vmatprep.mubr.bf16.mxu0 0
        %1029 = vmatmul.mubr.bf16.gmra.mrb[0].mxu0 %v991
        %v1030 = vpop.f32.mrb[0].mxu0
        %v1031 = vadd.f32 0.0, %v1030
        %v1032 = vpop.f32.mrb[0].mxu0
        %v1033 = vpop.f32.mrb[0].mxu0
        %v1034 = vpop.f32.mrb[0].mxu0
        %1035 = vdwg.mxu0
        %v1036 = vld [vmem:[#allocation5] sm:$0xff]
        %1038 = vset.pattern.permute.xlu0 0
        %1039 = vperm.xlu0 %1038, %v969
        %v1040 = vpop.permute.xlu0 %1039
        %v1042 = vmul.f32 %v1040, %v1036
        %1044 = vrot.lane.b32.xlu0 %v1031, 16
        %v1045 = vpop.permute.xlu0 %1044
        %v1047 = vadd.f32 %v1042, %v1045
        %vm1048 = vcmask 195712
        %1049 = vst.msk [vmem:[#allocation5] sm:$0xff] %vm1048, %v1047
        %v1050 = vld [vmem:[#allocation2] sm:$0xf]
        %v1052 = vunpack.c.l.b16 %v1050
        %v1053 = vpack.c.b16 %v1052, %v1052
        %1054 = vrot.lane.b32.xlu0 %v1053, 104
        %v1055 = vpop.permute.xlu0 %1054
        %1056 = vrot.lane.b32.xlu0 %v624, 104
        %v1057 = vpop.permute.xlu0 %1056
        %v1059 = vsel %vm626, %v1055, 0
        %v1062 = vsel %vm626, %v1057, 0
        %1064 = vmatprep.subr.bf16.mxu0 0
        %1065 = vmatpush1.bf16.xpose.msra.mxu0 %v1062
        %1066 = vmatprep.subr.bf16.mxu0 0
        %1067 = vmatpush1.bf16.xpose.msra.mxu0 0
        %1068 = vmatprep.subr.bf16.mxu0 0
        %1069 = vmatpush1.bf16.xpose.msra.mxu0 0
        %1070 = vmatprep.subr.bf16.mxu0 0
        %1071 = vmatpush1.bf16.xpose.msra.mxu0 0
        %1072 = vmatprep.subr.bf16.mxu0 0
        %1073 = vmatpush1.bf16.xpose.msra.mxu0 0
        %1074 = vmatprep.subr.bf16.mxu0 0
        %1075 = vmatpush1.bf16.xpose.msra.mxu0 0
        %1076 = vmatprep.subr.bf16.mxu0 0
        %1077 = vmatpush1.bf16.xpose.msra.mxu0 0
        %1078 = vmatprep.subr.bf16.mxu0 0
        %1079 = vmatpush1.bf16.xpose.msra.mxu0 0
        %1080 = vmatprep.subr.bf16.mxu0 0
        %1081 = vmatpush1.bf16.xpose.msra.mxu0 0
        %1082 = vmatprep.subr.bf16.mxu0 0
        %1083 = vmatpush1.bf16.xpose.msra.mxu0 0
        %1084 = vmatprep.subr.bf16.mxu0 0
        %1085 = vmatpush1.bf16.xpose.msra.mxu0 0
        %1086 = vmatprep.subr.bf16.mxu0 0
        %1087 = vmatpush1.bf16.xpose.msra.mxu0 0
        %1088 = vmatprep.subr.bf16.mxu0 0
        %1089 = vmatpush1.bf16.xpose.msra.mxu0 0
        %1090 = vmatprep.subr.bf16.mxu0 0
        %1091 = vmatpush1.bf16.xpose.msra.mxu0 0
        %1092 = vmatprep.subr.bf16.mxu0 0
        %1093 = vmatpush1.bf16.xpose.msra.mxu0 0
        %1094 = vmatprep.subr.bf16.mxu0 0
        %1095 = vmatpush1.bf16.xpose.msra.mxu0 0
        %1096 = vmatprep.mubr.bf16.mxu0 0
        %1097 = vmatmul.mubr.bf16.gmra.mrb[0].mxu0 %v1059
        %v1098 = vpop.f32.mrb[0].mxu0
        %v1099 = vadd.f32 0.0, %v1098
        %v1100 = vpop.f32.mrb[0].mxu0
        %v1101 = vpop.f32.mrb[0].mxu0
        %v1102 = vpop.f32.mrb[0].mxu0
        %1103 = vdwg.mxu0
        %s1104 = scalar_lea.vmem [#allocation3], 24
        %v1105 = vld [vmem:[%s1104] sm:$0xff]
        %s1106 = scalar_lea.vmem [#allocation4], 24
        %v1107 = vld [vmem:[%s1106] sm:$0xff]
        %v1108 = vsel %vm626, %v1099, -inf
        %1109 = vmax.xlane.f32.xlu0 %v1108
        %v1110 = vpop.xlane.xlu0 %1109
        %v1111 = vmax.f32 %v1105, %v1110
        %v1112 = vsub.f32 %v1105, %v1111
        %v1113 = vmul.f32 %v1112, 1.442695
        %v1114 = vpow.pop %v1113
        %1116 = vset.pattern.permute.xlu0 0
        %1117 = vperm.xlu0 %1116, %v1111
        %v1118 = vpop.permute.xlu0 %1117
        %v1120 = vsub.f32 %v1099, %v1118
        %v1121 = vpack.c.bf16 %v1120, %v1120
        %v1123 = vmul.bf16 %v1121, 1069105081
        %v1124 = vpow.bf16.pop %v1123
        %v1125 = vmul.f32 %v1114, %v1107
        %v1126 = vunpack.c.l.bf16 %v1124
        %v1127 = vsel %vm626, %v1126, 0.0
        %1128 = vadd.xlane.f32.xlu0 %v1127
        %v1129 = vpop.xlane.xlu0 %1128
        %v1130 = vadd.f32 %v1125, %v1129
        %1131 = vst.msk [vmem:[%s1106] sm:$0xff] %vm698, %v1130
        %1132 = vst.msk [vmem:[%s1104] sm:$0xff] %vm698, %v1111
        %1133 = vrot.lane.b32.xlu0 %v624, 72
        %v1134 = vpop.permute.xlu0 %1133
        %v1136 = vsel %vm626, %v1124, 0
        %v1139 = vsel %vm707, %v1134, 0
        %1141 = vmatprep.subr.bf16.mxu0 0
        %1142 = vmatpush1.bf16.msra.mxu0 %v1139
        %1143 = vmatprep.subr.bf16.mxu0 0
        %1144 = vmatpush1.bf16.msra.mxu0 0
        %1145 = vmatprep.subr.bf16.mxu0 0
        %1146 = vmatpush1.bf16.msra.mxu0 0
        %1147 = vmatprep.subr.bf16.mxu0 0
        %1148 = vmatpush1.bf16.msra.mxu0 0
        %1149 = vmatprep.subr.bf16.mxu0 0
        %1150 = vmatpush1.bf16.msra.mxu0 0
        %1151 = vmatprep.subr.bf16.mxu0 0
        %1152 = vmatpush1.bf16.msra.mxu0 0
        %1153 = vmatprep.subr.bf16.mxu0 0
        %1154 = vmatpush1.bf16.msra.mxu0 0
        %1155 = vmatprep.subr.bf16.mxu0 0
        %1156 = vmatpush1.bf16.msra.mxu0 0
        %1157 = vmatprep.subr.bf16.mxu0 0
        %1158 = vmatpush1.bf16.msra.mxu0 0
        %1159 = vmatprep.subr.bf16.mxu0 0
        %1160 = vmatpush1.bf16.msra.mxu0 0
        %1161 = vmatprep.subr.bf16.mxu0 0
        %1162 = vmatpush1.bf16.msra.mxu0 0
        %1163 = vmatprep.subr.bf16.mxu0 0
        %1164 = vmatpush1.bf16.msra.mxu0 0
        %1165 = vmatprep.subr.bf16.mxu0 0
        %1166 = vmatpush1.bf16.msra.mxu0 0
        %1167 = vmatprep.subr.bf16.mxu0 0
        %1168 = vmatpush1.bf16.msra.mxu0 0
        %1169 = vmatprep.subr.bf16.mxu0 0
        %1170 = vmatpush1.bf16.msra.mxu0 0
        %1171 = vmatprep.subr.bf16.mxu0 0
        %1172 = vmatpush1.bf16.msra.mxu0 0
        %1173 = vmatprep.mubr.bf16.mxu0 0
        %1174 = vmatmul.mubr.bf16.gmra.mrb[0].mxu0 %v1136
        %v1175 = vpop.f32.mrb[0].mxu0
        %v1176 = vadd.f32 0.0, %v1175
        %v1177 = vpop.f32.mrb[0].mxu0
        %v1178 = vpop.f32.mrb[0].mxu0
        %v1179 = vpop.f32.mrb[0].mxu0
        %1180 = vdwg.mxu0
        %v1181 = vld [vmem:[#allocation5] sm:$0xff]
        %1183 = vset.pattern.permute.xlu0 0
        %1184 = vperm.xlu0 %1183, %v1114
        %v1185 = vpop.permute.xlu0 %1184
        %v1187 = vmul.f32 %v1185, %v1181
        %1189 = vrot.lane.b32.xlu0 %v1176, 24
        %v1190 = vpop.permute.xlu0 %1189
        %v1192 = vadd.f32 %v1187, %v1190
        %vm1193 = vcmask 261312
        %1194 = vst.msk [vmem:[#allocation5] sm:$0xff] %vm1193, %v1192
        // Predicated region
        $region81: #{tpu_custom_call.1} parent=59 // pred_check
          %p1195 = pneg %p469
        $region82: #{tpu_custom_call.1} parent=59 // pred_check_branch
          %1197 = sbr.rel (%p1195) target = $region84
        $region83: #{tpu_custom_call.1} parent=59 // pred_region
          %v1198 = vld [vmem:[#allocation5] sm:$0xff]
          %v1199 = vld [vmem:[#allocation4] sm:$0xff]
          %v1200 = vrcp.pop %v1199
          %1202 = vset.pattern.permute.xlu0 0
          %1203 = vperm.xlu0 %1202, %v1200
          %v1204 = vpop.permute.xlu0 %1203
          %v1206 = vmul.f32 %v1198, %v1204
          %1207 = vst.msk [vmem:[#allocation5] sm:$0xff] %vm626, %v1206
          %v1208 = vld [vmem:[#allocation5] sm:$0xff]
          %v1209 = vld [vmem:[%s816] sm:$0xff]
          %v1210 = vrcp.pop %v1209
          %1212 = vset.pattern.permute.xlu0 0
          %1213 = vperm.xlu0 %1212, %v1210
          %v1214 = vpop.permute.xlu0 %1213
          %v1216 = vmul.f32 %v1208, %v1214
          %1217 = vst.msk [vmem:[#allocation5] sm:$0xff] %vm903, %v1216
          %v1218 = vld [vmem:[#allocation5] sm:$0xff]
          %v1219 = vld [vmem:[%s961] sm:$0xff]
          %v1220 = vrcp.pop %v1219
          %1222 = vset.pattern.permute.xlu0 0
          %1223 = vperm.xlu0 %1222, %v1220
          %v1224 = vpop.permute.xlu0 %1223
          %v1226 = vmul.f32 %v1218, %v1224
          %1227 = vst.msk [vmem:[#allocation5] sm:$0xff] %vm1048, %v1226
          %v1228 = vld [vmem:[#allocation5] sm:$0xff]
          %v1229 = vld [vmem:[%s1106] sm:$0xff]
          %v1230 = vrcp.pop %v1229
          %1232 = vset.pattern.permute.xlu0 0
          %1233 = vperm.xlu0 %1232, %v1230
          %v1234 = vpop.permute.xlu0 %1233
          %v1236 = vmul.f32 %v1228, %v1234
          %1237 = vst.msk [vmem:[#allocation5] sm:$0xff] %vm1193, %v1236
          %v1238 = vld [vmem:[#allocation5] sm:$0xff]
          %v1239 = vpack.c.bf16 %v1238, %v1238
          %v1240 = vld [vmem:[%s6] sm:$0xf]
          %v1241 = vld [vmem:[%s6 + $0x4] sm:$0xf]
          %v1242 = vld [vmem:[%s6 + $0x8] sm:$0xf]
          %v1243 = vld [vmem:[%s6 + $0xc] sm:$0xf]
          %v1244 = vld [vmem:[%s7] sm:$0x1]
          %v1246 = vlaneseq
          %v1247 = vshrl.u32 %v1246, 7
          %v1248 = vsub.s32 0, %v1247
          %v1249 = vrot.slane %v1244, %v1248
          %v1255 = vunpack.c.l.b16 %v1240
          %v1256 = vunpack.c.l.b16 %v1241
          %v1257 = vunpack.c.l.b16 %v1242
          %v1258 = vunpack.c.l.b16 %v1243
          %v1259 = vpack.c.b16 %v1256, %v1255
          %v1260 = vpack.c.b16 %v1258, %v1257
          %v1264 = vsel %vm580, %v1239, 0
          %1266 = vmatprep.subr.bf16.mxu0 0
          %1267 = vmatpush1.bf16.msra.mxu0 %v1259
          %1268 = vmatprep.subr.bf16.mxu0 0
          %1269 = vmatpush1.bf16.msra.mxu0 %v1260
          %1270 = vmatprep.subr.bf16.mxu0 0
          %1271 = vmatpush1.bf16.msra.mxu0 0
          %1272 = vmatprep.subr.bf16.mxu0 0
          %1273 = vmatpush1.bf16.msra.mxu0 0
          %1274 = vmatprep.subr.bf16.mxu0 0
          %1275 = vmatpush1.bf16.msra.mxu0 0
          %1276 = vmatprep.subr.bf16.mxu0 0
          %1277 = vmatpush1.bf16.msra.mxu0 0
          %1278 = vmatprep.subr.bf16.mxu0 0
          %1279 = vmatpush1.bf16.msra.mxu0 0
          %1280 = vmatprep.subr.bf16.mxu0 0
          %1281 = vmatpush1.bf16.msra.mxu0 0
          %1282 = vmatprep.subr.bf16.mxu0 0
          %1283 = vmatpush1.bf16.msra.mxu0 0
          %1284 = vmatprep.subr.bf16.mxu0 0
          %1285 = vmatpush1.bf16.msra.mxu0 0
          %1286 = vmatprep.subr.bf16.mxu0 0
          %1287 = vmatpush1.bf16.msra.mxu0 0
          %1288 = vmatprep.subr.bf16.mxu0 0
          %1289 = vmatpush1.bf16.msra.mxu0 0
          %1290 = vmatprep.subr.bf16.mxu0 0
          %1291 = vmatpush1.bf16.msra.mxu0 0
          %1292 = vmatprep.subr.bf16.mxu0 0
          %1293 = vmatpush1.bf16.msra.mxu0 0
          %1294 = vmatprep.subr.bf16.mxu0 0
          %1295 = vmatpush1.bf16.msra.mxu0 0
          %1296 = vmatprep.subr.bf16.mxu0 0
          %1297 = vmatpush1.bf16.msra.mxu0 0
          %1298 = vmatprep.mubr.bf16.mxu0 0
          %1299 = vmatmul.mubr.bf16.gmra.mrb[0].mxu0 %v1264
          %v1300 = vpop.f32.mrb[0].mxu0
          %v1301 = vadd.f32 %v1249, %v1300
          %v1302 = vpop.f32.mrb[0].mxu0
          %v1303 = vpop.f32.mrb[0].mxu0
          %v1304 = vpop.f32.mrb[0].mxu0
          %1305 = vdwg.mxu0
          %v1306 = vld [vmem:[%s409] sm:$0xff]
          %v1307 = vadd.f32 %v1301, %v1306
          %v1308 = vsel %vm580, %v1307, 0.0
          %1309 = vadd.xlane.f32.xlu0 %v1308
          %v1310 = vpop.xlane.xlu0 %1309
          %v1311 = vrcp.pop 32.0
          %v1312 = vmul.f32 %v1310, %v1311
          %v1313 = vsub.f32 %v1307, %v1312
          %v1314 = vmul.f32 %v1313, %v1313
          %v1315 = vsel %vm580, %v1314, 0.0
          %1316 = vadd.xlane.f32.xlu0 %v1315
          %v1317 = vpop.xlane.xlu0 %1316
          %v1318 = vmul.f32 %v1317, %v1311
          %v1319 = vadd.f32 %v1318, 1e-05
          %v1320 = vrsqrt.pop %v1319
          %v1321 = vmul.f32 %v1313, %v1320
          %v1322 = vld [vmem:[%s8] sm:$0x1]
          %v1324 = vlaneseq
          %v1325 = vshrl.u32 %v1324, 7
          %v1326 = vsub.s32 0, %v1325
          %v1327 = vrot.slane %v1322, %v1326
          %v1329 = vmul.f32 %v1321, %v1327
          %v1330 = vld [vmem:[%s9] sm:$0x1]
          %v1332 = vlaneseq
          %v1333 = vshrl.u32 %v1332, 7
          %v1334 = vsub.s32 0, %v1333
          %v1335 = vrot.slane %v1330, %v1334
          %v1337 = vadd.f32 %v1329, %v1335
          %1338 = vst.msk [vmem:[%s467] sm:$0xff] %vm580, %v1337
        $region84: #{tpu_custom_call.1} parent=59 // pred_fallthru
          _
        %s1339 = sand.u32 %s284, 1
        %s1340 = scalar_lea.sflag [#allocation8], %s1339
        %s1341 = sand.u32 %s284, 1
        %s1342 = smul.addr %s1341, 8
        %s1343 = scalar_lea.vmem [#allocation14], %s1342
        // Predicated region
        $region85: #{tpu_custom_call.1} parent=59 // pred_check
          %p1344 = pneg %p294
        $region86: #{tpu_custom_call.1} parent=59 // pred_check_branch
          %1346 = sbr.rel (%p1344) target = $region88
        $region87: #{tpu_custom_call.1} parent=59 // pred_region
          %s1348 = ssub.s32 128, 128
          %1349 = vsyncadd %s1340, %s1348
          %s1350 = sadd.s32 %s37, %s36
          %s1351 = smul.addr %s1350, 128
          %s1352 = scalar_lea.hbm %s10, %s1351
          %s1354 = sshll.u32 %s1343, 4
          %s1355 = int_to_ptr.vmem [resolvable:$true] %s1354
          %1357 = dma.vmem_to_hbm [thread:$0]  %s1355, 128, %s1352, %s1340
        $region88: #{tpu_custom_call.1} parent=59 // pred_fallthru
          _
      $region60: #{tpu_custom_call.1} parent=5 // pred_fallthru
        _
      %p1358 = scmp.le.s32.totalorder 2, %s26
      // Predicated region
      $region89: #{tpu_custom_call.1} parent=5 // pred_check
        %p1359 = pneg %p1358
      $region90: #{tpu_custom_call.1} parent=5 // pred_check_branch
        %1361 = sbr.rel (%p1359) target = $region92
      $region91: #{tpu_custom_call.1} parent=5 // pred_region
        %s1362 = ssub.s32 %s26, 2
        // Predicated region
        $region93: #{tpu_custom_call.1} parent=91 // pred_check
          %p1363 = pneg %p300
        $region94: #{tpu_custom_call.1} parent=91 // pred_check_branch
          %1365 = sbr.rel (%p1363) target = $region96
        $region95: #{tpu_custom_call.1} parent=91 // pred_region
          %s1366 = sand.u32 %s285, 1
          %s1367 = scalar_lea.sflag [#allocation8], %s1366
          %s1368 = sand.u32 %s285, 1
          %s1369 = smul.addr %s1368, 8
          %s1370 = scalar_lea.vmem [#allocation14], %s1369
          %1371 = dma.done %s1367, 128
        $region96: #{tpu_custom_call.1} parent=91 // pred_fallthru
          _
      $region92: #{tpu_custom_call.1} parent=5 // pred_fallthru
        _
    $region6: #{tpu_custom_call.1} parent=1 // loop_footer
      %s30 = sadd.s32 1, %s26
    $region7: #{tpu_custom_call.1} parent=1 // loop_footer_branch
      %25 = sbr.rel target = $region3
    $region8: #{tpu_custom_call.1} parent=1 // loop_exit
      _
    %1372 = vsyncpa [#allocation7], 1
    %s1373 = scalar_lea.sflag [#allocation7], 1
    %1374 = vsyncpa %s1373, 1
    %1375 = vsyncpa [#allocation10], 1
    %s1376 = scalar_lea.sflag [#allocation10], 1
    %1377 = vsyncpa %s1376, 1
    %1378 = vsyncpa [#allocation13], 1
    %1379 = vsyncpa [#allocation8], 1
    %s1380 = scalar_lea.sflag [#allocation8], 1
    %1381 = vsyncpa %s1380, 1

</llo_original>
